<compile_context>
chip_gen: v5e
topology: v5e:2x2
jax: 0.10.0
libtpu: 0.0.40
codegen_flags: <defaults>
</compile_context>

<pallas_src>
import functools

import jax
import jax.numpy as jnp
from jax.experimental import pallas as pl
from jax.experimental.pallas import tpu as pltpu


def _feat_inter_kernel(num_units,
                       v_ref, e_ref,
                       we_ref, wv_ref,
                       bv_ref, be_ref,
                       v_out_ref, e_out_ref):
    """Runs all stacked CrossCompressUnits for one (TB, D) batch tile in VMEM.

    we_ref : [U, 2, D]  rows = (w_vv, w_ve)   -- both dotted with e
    wv_ref : [U, 2, D]  rows = (w_ev, w_ee)   -- both dotted with v
    bv_ref, be_ref : [U, D]
    """
    v = v_ref[...].astype(jnp.float32)   # [TB, D]
    e = e_ref[...].astype(jnp.float32)   # [TB, D]

    # Hoist weight/bias loads + casts out of the unit loop (tiny, lane-dense).
    we = we_ref[...].astype(jnp.float32)   # [U, 2, D]
    wv = wv_ref[...].astype(jnp.float32)   # [U, 2, D]
    bv = bv_ref[...].astype(jnp.float32)   # [U, D]
    be = be_ref[...].astype(jnp.float32)   # [U, D]

    # Contract the last (D) dim of the activations against the last (D) dim of
    # the [2, D] per-unit weight slab:  out[b, j] = sum_d x[b, d] * w[j, d].
    dn = (((1,), (1,)), ((), ()))

    # Static unroll: the right choice for small num_units (<= ~8).  For many
    # units, switch to lax.fori_loop with we_ref[pl.ds(u, 1)] row access to
    # bound vreg live ranges / code size.
    for u in range(num_units):
        # Compress the cross matrix C = v e^T without materializing it:
        #   (C @ w)[b,i]   = v[b,i] * (e[b] . w)
        #   (C^T @ w)[b,i] = e[b,i] * (v[b] . w)
        # The 4 row-dots run on the (otherwise idle) MXU instead of the XLU.
        s_e = jax.lax.dot_general(e, we[u], dn,
                                  preferred_element_type=jnp.float32)  # [TB, 2]
        s_v = jax.lax.dot_general(v, wv[u], dn,
                                  preferred_element_type=jnp.float32)  # [TB, 2]
        s_vv = s_e[:, 0:1]   # e . w_vv
        s_ve = s_e[:, 1:2]   # e . w_ve
        s_ev = s_v[:, 0:1]   # v . w_ev
        s_ee = s_v[:, 1:2]   # v . w_ee

        v_new = v * s_vv + e * s_ev + bv[u:u + 1, :]
        e_new = v * s_ve + e * s_ee + be[u:u + 1, :]
        v, e = v_new, e_new

    v_out_ref[...] = v.astype(v_out_ref.dtype)
    e_out_ref[...] = e.astype(e_out_ref.dtype)


def feat_inter_layers(v_input, e_input, params, *, block_batch=256):
    """Pallas wrapper. params = dict of stacked [num_units, dim] arrays.

    block_batch: batch-tile size.  Sweep 256-1024 on v5e/v6e; roughly halve on
    v7x (64 MiB VMEM, 2 TensorCores share the grid via the 'parallel' axis).
    """
    B, D = v_input.shape
    num_units = params["w_vv"].shape[0]

    # Stack weights lane-dense for the in-kernel MXU contractions: [U, 2, D].
    w_e = jnp.stack([params["w_vv"], params["w_ve"]], axis=1)
    w_v = jnp.stack([params["w_ev"], params["w_ee"]], axis=1)

    # Batch tile: multiple of 8 (f32 sublane); pad B up to a tile multiple.
    tb = max(8, (min(block_batch, B) // 8) * 8)
    pad = (-B) % tb
    if pad:
        v_in = jnp.pad(v_input, ((0, pad), (0, 0)))
        e_in = jnp.pad(e_input, ((0, pad), (0, 0)))
    else:
        v_in, e_in = v_input, e_input
    b_padded = B + pad
    grid = (b_padded // tb,)

    io_spec = pl.BlockSpec((tb, D), lambda i: (i, 0))               # batch-tiled
    w_spec = pl.BlockSpec((num_units, 2, D), lambda i: (0, 0, 0))   # VMEM-resident
    b_spec = pl.BlockSpec((num_units, D), lambda i: (0, 0))         # VMEM-resident

    # Rough VMEM budget: 4 io arrays x 2 pipeline buffers x tile, plus
    # double-buffered weights/biases, plus slack for in-kernel temporaries.
    itemsize = jnp.dtype(v_input.dtype).itemsize
    est = (4 * 2 * tb * D * itemsize
           + 2 * (2 * num_units * 2 * D * 4 + 2 * num_units * D * 4)
           + (4 << 20))
    # >= 32 MiB (raises v5e's 16 MiB default scoped limit), <= 64 MiB (v7x safe).
    vmem_limit = int(min(64 << 20, max(32 << 20, 2 * est)))

    kernel = functools.partial(_feat_inter_kernel, num_units)

    v_out, e_out = pl.pallas_call(
        kernel,
        out_shape=(
            jax.ShapeDtypeStruct((b_padded, D), v_input.dtype),
            jax.ShapeDtypeStruct((b_padded, D), e_input.dtype),
        ),
        grid_spec=pltpu.PrefetchScalarGridSpec(
            num_scalar_prefetch=0,
            grid=grid,
            in_specs=[io_spec, io_spec, w_spec, w_spec, b_spec, b_spec],
            out_specs=(io_spec, io_spec),
        ),
        compiler_params=pltpu.CompilerParams(
            dimension_semantics=("parallel",),   # batch tiles are independent
            vmem_limit_bytes=vmem_limit,
        ),
    )(v_in, e_in, w_e, w_v, params["b_v"], params["b_e"])

    if pad:
        v_out = v_out[:B]
        e_out = e_out[:B]
    return v_out, e_out


def feat_inter_layers_ref(v, e, params):
    """Plain-JAX reference mirroring the PyTorch code (materializes C)."""
    num_units, _ = params["w_vv"].shape
    hi = jax.lax.Precision.HIGHEST
    for u in range(num_units):
        c = v[:, :, None] * e[:, None, :]                 # [B, D, D]
        ct = jnp.swapaxes(c, 1, 2)
        v_new = (jnp.einsum("bij,j->bi", c, params["w_vv"][u], precision=hi)
                 + jnp.einsum("bij,j->bi", ct, params["w_ev"][u], precision=hi)
                 + params["b_v"][u])
        e_new = (jnp.einsum("bij,j->bi", c, params["w_ve"][u], precision=hi)
                 + jnp.einsum("bij,j->bi", ct, params["w_ee"][u], precision=hi)
                 + params["b_e"][u])
        v, e = v_new, e_new
    return v, e


def init_params(key, dim, num_units):
    """Deterministic init matching torch.nn.Linear(dim, 1, bias=False):
    uniform(-1/sqrt(dim), 1/sqrt(dim)); bias_v / bias_e are zeros."""
    bound = 1.0 / (dim ** 0.5)
    keys = jax.random.split(key, 4)
    names = ["w_vv", "w_ev", "w_ve", "w_ee"]
    params = {
        name: jax.random.uniform(k, (num_units, dim), jnp.float32,
                                 minval=-bound, maxval=bound)
        for name, k in zip(names, keys)
    }
    params["b_v"] = jnp.zeros((num_units, dim), jnp.float32)
    params["b_e"] = jnp.zeros((num_units, dim), jnp.float32)
    return params


if __name__ == "__main__":
    # D=128 keeps the lane dimension dense; B=512 with TB=256 exercises a
    # 2-step parallel grid.  Small enough for the O(B*D*D) reference.
    batch, dim, num_units = 512, 128, 2

    root = jax.random.PRNGKey(0)
    k_v, k_e, k_p = jax.random.split(root, 3)
    v_input = jax.random.normal(k_v, (batch, dim), jnp.float32)
    e_input = jax.random.normal(k_e, (batch, dim), jnp.float32)
    params = init_params(k_p, dim, num_units)

    v_out, e_out = feat_inter_layers(v_input, e_input, params, block_batch=256)
    jax.block_until_ready((v_out, e_out))

    v_ref, e_ref = feat_inter_layers_ref(v_input, e_input, params)

    def rel_err(a, b):
        return float(jnp.linalg.norm((a - b).ravel())
                     / (jnp.linalg.norm(b.ravel()) + 1e-12))

    # The factorization is exact; the tolerance only covers the MXU's f32
    # matmul path (bf16 passes) used for the in-kernel row-dot-products.
    assert rel_err(v_out, v_ref) < 1e-2, ("v", rel_err(v_out, v_ref))
    assert rel_err(e_out, e_ref) < 1e-2, ("e", rel_err(e_out, e_ref))

    print("KERNEL_OK")
</pallas_src>

<mosaic_0001>
module attributes {stable_mosaic.version = 11 : i64} {
  func.func @_feat_inter_kernel(%arg0: i32, %arg1: memref<256x128xf32, #tpu.memory_space<vmem>>, %arg2: memref<256x128xf32, #tpu.memory_space<vmem>>, %arg3: memref<2x2x128xf32, #tpu.memory_space<vmem>>, %arg4: memref<2x2x128xf32, #tpu.memory_space<vmem>>, %arg5: memref<2x128xf32, #tpu.memory_space<vmem>>, %arg6: memref<2x128xf32, #tpu.memory_space<vmem>>, %arg7: memref<256x128xf32, #tpu.memory_space<vmem>>, %arg8: memref<256x128xf32, #tpu.memory_space<vmem>>) attributes {dimension_semantics = [#tpu.dimension_semantics<parallel>], iteration_bounds = array<i64: 2>, scalar_prefetch = 0 : i64, scratch_operands = 0 : i64, tpu.core_type = #tpu.core_type<tc>, window_params = [{transform_indices = @transform_0, window_bounds = array<i64: 256, 128>}, {transform_indices = @transform_1, window_bounds = array<i64: 256, 128>}, {pipeline_mode = #tpu.pipeline_mode<synchronous>, transform_indices = @transform_2, window_bounds = array<i64: 2, 2, 128>}, {pipeline_mode = #tpu.pipeline_mode<synchronous>, transform_indices = @transform_3, window_bounds = array<i64: 2, 2, 128>}, {pipeline_mode = #tpu.pipeline_mode<synchronous>, transform_indices = @transform_4, window_bounds = array<i64: 2, 128>}, {pipeline_mode = #tpu.pipeline_mode<synchronous>, transform_indices = @transform_5, window_bounds = array<i64: 2, 128>}, {transform_indices = @transform_6, window_bounds = array<i64: 256, 128>}, {transform_indices = @transform_7, window_bounds = array<i64: 256, 128>}]} {
    %c0 = arith.constant 0 : index
    %c0_0 = arith.constant 0 : index
    %0 = vector.load %arg1[%c0, %c0_0] : memref<256x128xf32, #tpu.memory_space<vmem>>, vector<256x128xf32>
    %c0_1 = arith.constant 0 : index
    %c0_2 = arith.constant 0 : index
    %1 = vector.load %arg2[%c0_1, %c0_2] : memref<256x128xf32, #tpu.memory_space<vmem>>, vector<256x128xf32>
    %c0_3 = arith.constant 0 : index
    %c0_4 = arith.constant 0 : index
    %c0_5 = arith.constant 0 : index
    %2 = vector.load %arg3[%c0_3, %c0_4, %c0_5] : memref<2x2x128xf32, #tpu.memory_space<vmem>>, vector<2x2x128xf32>
    %c0_6 = arith.constant 0 : index
    %c0_7 = arith.constant 0 : index
    %c0_8 = arith.constant 0 : index
    %3 = vector.load %arg4[%c0_6, %c0_7, %c0_8] : memref<2x2x128xf32, #tpu.memory_space<vmem>>, vector<2x2x128xf32>
    %c0_9 = arith.constant 0 : index
    %c0_10 = arith.constant 0 : index
    %4 = vector.load %arg5[%c0_9, %c0_10] : memref<2x128xf32, #tpu.memory_space<vmem>>, vector<2x128xf32>
    %c0_11 = arith.constant 0 : index
    %c0_12 = arith.constant 0 : index
    %5 = vector.load %arg6[%c0_11, %c0_12] : memref<2x128xf32, #tpu.memory_space<vmem>>, vector<2x128xf32>
    %6 = vector.extract_strided_slice %2 {offsets = [0, 0, 0], sizes = [1, 2, 128], strides = [1, 1, 1]} : vector<2x2x128xf32> to vector<1x2x128xf32>
    %7 = vector.shape_cast %6 : vector<1x2x128xf32> to vector<2x128xf32>
    %cst = arith.constant dense<0.000000e+00> : vector<256x2xf32>
    %8 = tpu.matmul %1, %7, %cst {dimension_numbers = #tpu.dot_dimension_numbers<[1], [1], [0], [0], [0, 0, 1, 0], [], []>} : vector<256x128xf32>, vector<2x128xf32>, vector<256x2xf32> -> vector<256x2xf32>
    %9 = vector.extract_strided_slice %3 {offsets = [0, 0, 0], sizes = [1, 2, 128], strides = [1, 1, 1]} : vector<2x2x128xf32> to vector<1x2x128xf32>
    %10 = vector.shape_cast %9 : vector<1x2x128xf32> to vector<2x128xf32>
    %cst_13 = arith.constant dense<0.000000e+00> : vector<256x2xf32>
    %11 = tpu.matmul %0, %10, %cst_13 {dimension_numbers = #tpu.dot_dimension_numbers<[1], [1], [0], [0], [0, 0, 1, 0], [], []>} : vector<256x128xf32>, vector<2x128xf32>, vector<256x2xf32> -> vector<256x2xf32>
    %12 = vector.extract_strided_slice %8 {offsets = [0, 0], sizes = [256, 1], strides = [1, 1]} : vector<256x2xf32> to vector<256x1xf32>
    %13 = vector.extract_strided_slice %8 {offsets = [0, 1], sizes = [256, 1], strides = [1, 1]} : vector<256x2xf32> to vector<256x1xf32>
    %14 = vector.extract_strided_slice %11 {offsets = [0, 0], sizes = [256, 1], strides = [1, 1]} : vector<256x2xf32> to vector<256x1xf32>
    %15 = vector.extract_strided_slice %11 {offsets = [0, 1], sizes = [256, 1], strides = [1, 1]} : vector<256x2xf32> to vector<256x1xf32>
    %16 = vector.broadcast %12 : vector<256x1xf32> to vector<256x128xf32>
    %17 = arith.mulf %0, %16 : vector<256x128xf32>
    %18 = vector.broadcast %14 : vector<256x1xf32> to vector<256x128xf32>
    %19 = arith.mulf %1, %18 : vector<256x128xf32>
    %20 = arith.addf %17, %19 : vector<256x128xf32>
    %21 = vector.extract_strided_slice %4 {offsets = [0, 0], sizes = [1, 128], strides = [1, 1]} : vector<2x128xf32> to vector<1x128xf32>
    %22 = vector.broadcast %21 : vector<1x128xf32> to vector<256x128xf32>
    %23 = arith.addf %20, %22 : vector<256x128xf32>
    %24 = vector.broadcast %13 : vector<256x1xf32> to vector<256x128xf32>
    %25 = arith.mulf %0, %24 : vector<256x128xf32>
    %26 = vector.broadcast %15 : vector<256x1xf32> to vector<256x128xf32>
    %27 = arith.mulf %1, %26 : vector<256x128xf32>
    %28 = arith.addf %25, %27 : vector<256x128xf32>
    %29 = vector.extract_strided_slice %5 {offsets = [0, 0], sizes = [1, 128], strides = [1, 1]} : vector<2x128xf32> to vector<1x128xf32>
    %30 = vector.broadcast %29 : vector<1x128xf32> to vector<256x128xf32>
    %31 = arith.addf %28, %30 : vector<256x128xf32>
    %32 = vector.extract_strided_slice %2 {offsets = [1, 0, 0], sizes = [1, 2, 128], strides = [1, 1, 1]} : vector<2x2x128xf32> to vector<1x2x128xf32>
    %33 = vector.shape_cast %32 : vector<1x2x128xf32> to vector<2x128xf32>
    %cst_14 = arith.constant dense<0.000000e+00> : vector<256x2xf32>
    %34 = tpu.matmul %31, %33, %cst_14 {dimension_numbers = #tpu.dot_dimension_numbers<[1], [1], [0], [0], [0, 0, 1, 0], [], []>} : vector<256x128xf32>, vector<2x128xf32>, vector<256x2xf32> -> vector<256x2xf32>
    %35 = vector.extract_strided_slice %3 {offsets = [1, 0, 0], sizes = [1, 2, 128], strides = [1, 1, 1]} : vector<2x2x128xf32> to vector<1x2x128xf32>
    %36 = vector.shape_cast %35 : vector<1x2x128xf32> to vector<2x128xf32>
    %cst_15 = arith.constant dense<0.000000e+00> : vector<256x2xf32>
    %37 = tpu.matmul %23, %36, %cst_15 {dimension_numbers = #tpu.dot_dimension_numbers<[1], [1], [0], [0], [0, 0, 1, 0], [], []>} : vector<256x128xf32>, vector<2x128xf32>, vector<256x2xf32> -> vector<256x2xf32>
    %38 = vector.extract_strided_slice %34 {offsets = [0, 0], sizes = [256, 1], strides = [1, 1]} : vector<256x2xf32> to vector<256x1xf32>
    %39 = vector.extract_strided_slice %34 {offsets = [0, 1], sizes = [256, 1], strides = [1, 1]} : vector<256x2xf32> to vector<256x1xf32>
    %40 = vector.extract_strided_slice %37 {offsets = [0, 0], sizes = [256, 1], strides = [1, 1]} : vector<256x2xf32> to vector<256x1xf32>
    %41 = vector.extract_strided_slice %37 {offsets = [0, 1], sizes = [256, 1], strides = [1, 1]} : vector<256x2xf32> to vector<256x1xf32>
    %42 = vector.broadcast %38 : vector<256x1xf32> to vector<256x128xf32>
    %43 = arith.mulf %23, %42 : vector<256x128xf32>
    %44 = vector.broadcast %40 : vector<256x1xf32> to vector<256x128xf32>
    %45 = arith.mulf %31, %44 : vector<256x128xf32>
    %46 = arith.addf %43, %45 : vector<256x128xf32>
    %47 = vector.extract_strided_slice %4 {offsets = [1, 0], sizes = [1, 128], strides = [1, 1]} : vector<2x128xf32> to vector<1x128xf32>
    %48 = vector.broadcast %47 : vector<1x128xf32> to vector<256x128xf32>
    %49 = arith.addf %46, %48 : vector<256x128xf32>
    %50 = vector.broadcast %39 : vector<256x1xf32> to vector<256x128xf32>
    %51 = arith.mulf %23, %50 : vector<256x128xf32>
    %52 = vector.broadcast %41 : vector<256x1xf32> to vector<256x128xf32>
    %53 = arith.mulf %31, %52 : vector<256x128xf32>
    %54 = arith.addf %51, %53 : vector<256x128xf32>
    %55 = vector.extract_strided_slice %5 {offsets = [1, 0], sizes = [1, 128], strides = [1, 1]} : vector<2x128xf32> to vector<1x128xf32>
    %56 = vector.broadcast %55 : vector<1x128xf32> to vector<256x128xf32>
    %57 = arith.addf %54, %56 : vector<256x128xf32>
    %c0_16 = arith.constant 0 : index
    %c0_17 = arith.constant 0 : index
    %58 = vector.load %arg7[%c0_16, %c0_17] : memref<256x128xf32, #tpu.memory_space<vmem>>, vector<256x128xf32>
    tpu.vector_store %arg7[%c0_16, %c0_17], %49 {strides = array<i32>} : memref<256x128xf32, #tpu.memory_space<vmem>>, vector<256x128xf32>,
    %c0_18 = arith.constant 0 : index
    %c0_19 = arith.constant 0 : index
    %59 = vector.load %arg8[%c0_18, %c0_19] : memref<256x128xf32, #tpu.memory_space<vmem>>, vector<256x128xf32>
    tpu.vector_store %arg8[%c0_18, %c0_19], %57 {strides = array<i32>} : memref<256x128xf32, #tpu.memory_space<vmem>>, vector<256x128xf32>,
    return
  }
  func.func @transform_0(%arg0: i32) -> (i32, i32) {
    %c0_i32 = arith.constant 0 : i32
    %c0_i32_0 = arith.constant 0 : i32
    return %arg0, %c0_i32 : i32, i32
  }
  func.func @transform_1(%arg0: i32) -> (i32, i32) {
    %c0_i32 = arith.constant 0 : i32
    %c0_i32_0 = arith.constant 0 : i32
    return %arg0, %c0_i32 : i32, i32
  }
  func.func @transform_2(%arg0: i32) -> (i32, i32, i32) {
    %c0_i32 = arith.constant 0 : i32
    %c0_i32_0 = arith.constant 0 : i32
    %c0_i32_1 = arith.constant 0 : i32
    %c0_i32_2 = arith.constant 0 : i32
    return %c0_i32, %c0_i32_0, %c0_i32_1 : i32, i32, i32
  }
  func.func @transform_3(%arg0: i32) -> (i32, i32, i32) {
    %c0_i32 = arith.constant 0 : i32
    %c0_i32_0 = arith.constant 0 : i32
    %c0_i32_1 = arith.constant 0 : i32
    %c0_i32_2 = arith.constant 0 : i32
    return %c0_i32, %c0_i32_0, %c0_i32_1 : i32, i32, i32
  }
  func.func @transform_4(%arg0: i32) -> (i32, i32) {
    %c0_i32 = arith.constant 0 : i32
    %c0_i32_0 = arith.constant 0 : i32
    %c0_i32_1 = arith.constant 0 : i32
    return %c0_i32, %c0_i32_0 : i32, i32
  }
  func.func @transform_5(%arg0: i32) -> (i32, i32) {
    %c0_i32 = arith.constant 0 : i32
    %c0_i32_0 = arith.constant 0 : i32
    %c0_i32_1 = arith.constant 0 : i32
    return %c0_i32, %c0_i32_0 : i32, i32
  }
  func.func @transform_6(%arg0: i32) -> (i32, i32) {
    %c0_i32 = arith.constant 0 : i32
    %c0_i32_0 = arith.constant 0 : i32
    return %arg0, %c0_i32 : i32, i32
  }
  func.func @transform_7(%arg0: i32) -> (i32, i32) {
    %c0_i32 = arith.constant 0 : i32
    %c0_i32_0 = arith.constant 0 : i32
    return %arg0, %c0_i32 : i32, i32
  }
}

</mosaic_0001>

<llo_original>
// kernel: tpu_custom_call.1
$region0: #{tpu_custom_call.1}
  #allocation0 [shape = 'u32[]', space=smem, size = 0x4, offset = 0x4, fixed_abs, tag = 'smem constant byte address 0x4 - core index']
  #allocation1 [shape = 'u32[72,128]{1,0:T(1,128)}', space=vmem, size = 0x9000, scoped, tag = 'internal scratch']
  %s0 = inlined_call_operand.hbm [shape: f32[512,128], index: 0, kind: input, shape index: {}]
  %s1 = inlined_call_operand.hbm [shape: f32[512,128], index: 1, kind: input, shape index: {}]
  %s2 = inlined_call_operand.hbm [shape: f32[2,2,128], index: 2, kind: input, shape index: {}]
  %s3 = inlined_call_operand.hbm [shape: f32[2,2,128], index: 3, kind: input, shape index: {}]
  %s4 = inlined_call_operand.vmem [shape: f32[2,128], index: 4, kind: input, shape index: {}]
  %s5 = inlined_call_operand.vmem [shape: f32[2,128], index: 5, kind: input, shape index: {}]
  %s6 = inlined_call_operand.hbm [shape: f32[512,128], index: 6, kind: output, shape index: {0}]
  %s7 = inlined_call_operand.hbm [shape: f32[512,128], index: 7, kind: output, shape index: {1}]
  %8 = xla_tuple %s6, %s7
  %s9 = sld [smem:[#allocation0]]
  $region81: #{tpu_custom_call.1} parent=0
    _
  %s11 = ssub.s32 1, %s9
  %s12 = scalar_select 0, %s11, %s9
  $region1: #{tpu_custom_call.1} parent=0
    #allocation2 [shape = 'u8[262144]{0}', space=vmem, size = 0x40000, scoped, tag = 'input window, operand 0']
    #allocation3 [shape = 's32[2]{0}', space=sflag, size = 0x8, scoped, tag = 'scoped memory for tpu_custom_call.1']
    #allocation4 [shape = 's32[2]{0}', space=sflag, size = 0x8, scoped, tag = 'scoped memory for tpu_custom_call.1']
    #allocation5 [shape = 'u8[262144]{0}', space=vmem, size = 0x40000, scoped, tag = 'input window, operand 1']
    #allocation6 [shape = 's32[2]{0}', space=sflag, size = 0x8, scoped, tag = 'scoped memory for tpu_custom_call.1']
    #allocation7 [shape = 'u8[2048]{0}', space=vmem, size = 0x800, scoped, tag = 'input window, operand 2, single buffered']
    #allocation8 [shape = 'u8[2048]{0}', space=vmem, size = 0x800, scoped, tag = 'input window, operand 3, single buffered']
    #allocation9 [shape = 's32[1]{0}', space=sflag, size = 0x4, scoped, tag = 'scoped memory for tpu_custom_call.1']
    #allocation10 [shape = 'u8[262144]{0}', space=vmem, size = 0x40000, scoped, tag = 'output window, operand 0']
    #allocation11 [shape = 'u8[262144]{0}', space=vmem, size = 0x40000, scoped, tag = 'output window, operand 1']
    #allocation12 [shape = 's32[2]{0}', space=sflag, size = 0x8, scoped, tag = 'scoped memory for tpu_custom_call.1']
    %13 = vsyncpa [#allocation3], 0
    %s14 = scalar_lea.sflag [#allocation3], 1
    %15 = vsyncpa %s14, 0
    %16 = vsyncpa [#allocation6], 0
    %s17 = scalar_lea.sflag [#allocation6], 1
    %18 = vsyncpa %s17, 0
    %19 = vsyncpa [#allocation9], 0
    %20 = vsyncpa [#allocation4], 0
    %s21 = scalar_lea.sflag [#allocation4], 1
    %22 = vsyncpa %s21, 0
    %23 = vsyncpa [#allocation12], 0
    %s24 = scalar_lea.sflag [#allocation12], 1
    %25 = vsyncpa %s24, 0
    loop: start=0, step=1, limit=4
    $region2: #{tpu_custom_call.1} parent=1 // loop_pre_header
      _
    $region3: #{tpu_custom_call.1} parent=1 // loop_header
      %s27 = sphi 0, %s31
      %p28 = scmp.ge.s32.totalorder %s27, 4
      %s37 = sphi 0, %s39
      %s40 = sphi 0, %s37
      %s41 = sphi 0, %s40
      %s57 = sphi 0, %s41
      %s63 = sphi 0, %s65
      %s66 = sphi 0, %s63
      %s67 = sphi 0, %s66
      %s83 = sphi 0, %s67
      %s87 = sphi 0, %s87
      %s89 = sphi 0, %s87
      %s90 = sphi 0, %s89
      %s104 = sphi 0, %s90
      %s108 = sphi 0, %s108
      %s110 = sphi 0, %s108
      %s111 = sphi 0, %s110
      %s125 = sphi 0, %s111
      %s129 = sphi 0, %s129
      %s131 = sphi 0, %s129
      %s132 = sphi 0, %s131
      %s146 = sphi 0, %s132
      %s150 = sphi 0, %s150
      %s152 = sphi 0, %s150
      %s153 = sphi 0, %s152
      %s167 = sphi 0, %s153
      %s173 = sphi 0, %s175
      %s176 = sphi 0, %s173
      %s177 = sphi 0, %s176
      %s193 = sphi 0, %s177
      %s199 = sphi 0, %s201
      %s202 = sphi 0, %s199
      %s203 = sphi 0, %s202
      %s219 = sphi 0, %s203
    $region4: #{tpu_custom_call.1} parent=1 // loop_header_branch
      %30 = sbr.rel (%p28) target = $region8
    $region5: #{tpu_custom_call.1} parent=1 // loop_body
      %s32 = ssub.s32 %s27, 1
      %s33 = ssub.s32 %s27, 2
      %s34 = sadd.s32 %s27, 1
      %s35 = ssub.s32 %s27, %s34
      %p36 = scmp.eq.s32.totalorder %s35, 0
      %s38 = sadd.s32 %s37, 1
      %s39 = scalar_select %p36, %s37, %s38
      %p42 = pneg %p36
      %p43 = scmp.eq.s32.totalorder %s27, 1
      %p44 = por %p42, %p43
      %p45 = scmp.ne.s32.totalorder %s37, %s40
      %p46 = scmp.eq.s32.totalorder %s27, 0
      %p47 = por %p45, %p46
      %p48 = scmp.ne.s32.totalorder %s37, %s40
      %p49 = scmp.eq.s32.totalorder %s32, 1
      %p50 = por %p48, %p49
      %p51 = scmp.ne.s32.totalorder %s40, %s41
      %p52 = scmp.eq.s32.totalorder %s32, 0
      %p53 = por %p51, %p52
      %p54 = scmp.ne.s32.totalorder %s40, %s41
      %p55 = scmp.eq.s32.totalorder %s33, 1
      %p56 = por %p54, %p55
      %p58 = scmp.ne.s32.totalorder %s41, %s57
      %p59 = scmp.eq.s32.totalorder %s33, 0
      %p60 = por %p58, %p59
      %s61 = ssub.s32 %s27, %s34
      %p62 = scmp.eq.s32.totalorder %s61, 0
      %s64 = sadd.s32 %s63, 1
      %s65 = scalar_select %p62, %s63, %s64
      %p68 = pneg %p62
      %p69 = scmp.eq.s32.totalorder %s27, 1
      %p70 = por %p68, %p69
      %p71 = scmp.ne.s32.totalorder %s63, %s66
      %p72 = scmp.eq.s32.totalorder %s27, 0
      %p73 = por %p71, %p72
      %p74 = scmp.ne.s32.totalorder %s63, %s66
      %p75 = scmp.eq.s32.totalorder %s32, 1
      %p76 = por %p74, %p75
      %p77 = scmp.ne.s32.totalorder %s66, %s67
      %p78 = scmp.eq.s32.totalorder %s32, 0
      %p79 = por %p77, %p78
      %p80 = scmp.ne.s32.totalorder %s66, %s67
      %p81 = scmp.eq.s32.totalorder %s33, 1
      %p82 = por %p80, %p81
      %p84 = scmp.ne.s32.totalorder %s67, %s83
      %p85 = scmp.eq.s32.totalorder %s33, 0
      %p86 = por %p84, %p85
      %s88 = sadd.s32 %s87, 1
      %p91 = scmp.eq.s32.totalorder %s27, 1
      %p92 = scmp.ne.s32.totalorder %s87, %s89
      %p93 = scmp.eq.s32.totalorder %s27, 0
      %p94 = por %p92, %p93
      %p95 = scmp.ne.s32.totalorder %s87, %s89
      %p96 = scmp.eq.s32.totalorder %s32, 1
      %p97 = por %p95, %p96
      %p98 = scmp.ne.s32.totalorder %s89, %s90
      %p99 = scmp.eq.s32.totalorder %s32, 0
      %p100 = por %p98, %p99
      %p101 = scmp.ne.s32.totalorder %s89, %s90
      %p102 = scmp.eq.s32.totalorder %s33, 1
      %p103 = por %p101, %p102
      %p105 = scmp.ne.s32.totalorder %s90, %s104
      %p106 = scmp.eq.s32.totalorder %s33, 0
      %p107 = por %p105, %p106
      %s109 = sadd.s32 %s108, 1
      %p112 = scmp.eq.s32.totalorder %s27, 1
      %p113 = scmp.ne.s32.totalorder %s108, %s110
      %p114 = scmp.eq.s32.totalorder %s27, 0
      %p115 = por %p113, %p114
      %p116 = scmp.ne.s32.totalorder %s108, %s110
      %p117 = scmp.eq.s32.totalorder %s32, 1
      %p118 = por %p116, %p117
      %p119 = scmp.ne.s32.totalorder %s110, %s111
      %p120 = scmp.eq.s32.totalorder %s32, 0
      %p121 = por %p119, %p120
      %p122 = scmp.ne.s32.totalorder %s110, %s111
      %p123 = scmp.eq.s32.totalorder %s33, 1
      %p124 = por %p122, %p123
      %p126 = scmp.ne.s32.totalorder %s111, %s125
      %p127 = scmp.eq.s32.totalorder %s33, 0
      %p128 = por %p126, %p127
      %s130 = sadd.s32 %s129, 1
      %p133 = scmp.eq.s32.totalorder %s27, 1
      %p134 = scmp.ne.s32.totalorder %s129, %s131
      %p135 = scmp.eq.s32.totalorder %s27, 0
      %p136 = por %p134, %p135
      %p137 = scmp.ne.s32.totalorder %s129, %s131
      %p138 = scmp.eq.s32.totalorder %s32, 1
      %p139 = por %p137, %p138
      %p140 = scmp.ne.s32.totalorder %s131, %s132
      %p141 = scmp.eq.s32.totalorder %s32, 0
      %p142 = por %p140, %p141
      %p143 = scmp.ne.s32.totalorder %s131, %s132
      %p144 = scmp.eq.s32.totalorder %s33, 1
      %p145 = por %p143, %p144
      %p147 = scmp.ne.s32.totalorder %s132, %s146
      %p148 = scmp.eq.s32.totalorder %s33, 0
      %p149 = por %p147, %p148
      %s151 = sadd.s32 %s150, 1
      %p154 = scmp.eq.s32.totalorder %s27, 1
      %p155 = scmp.ne.s32.totalorder %s150, %s152
      %p156 = scmp.eq.s32.totalorder %s27, 0
      %p157 = por %p155, %p156
      %p158 = scmp.ne.s32.totalorder %s150, %s152
      %p159 = scmp.eq.s32.totalorder %s32, 1
      %p160 = por %p158, %p159
      %p161 = scmp.ne.s32.totalorder %s152, %s153
      %p162 = scmp.eq.s32.totalorder %s32, 0
      %p163 = por %p161, %p162
      %p164 = scmp.ne.s32.totalorder %s152, %s153
      %p165 = scmp.eq.s32.totalorder %s33, 1
      %p166 = por %p164, %p165
      %p168 = scmp.ne.s32.totalorder %s153, %s167
      %p169 = scmp.eq.s32.totalorder %s33, 0
      %p170 = por %p168, %p169
      %s171 = ssub.s32 %s27, %s34
      %p172 = scmp.eq.s32.totalorder %s171, 0
      %s174 = sadd.s32 %s173, 1
      %s175 = scalar_select %p172, %s173, %s174
      %p178 = pneg %p172
      %p179 = scmp.eq.s32.totalorder %s27, 1
      %p180 = por %p178, %p179
      %p181 = scmp.ne.s32.totalorder %s173, %s176
      %p182 = scmp.eq.s32.totalorder %s27, 0
      %p183 = por %p181, %p182
      %p184 = scmp.ne.s32.totalorder %s173, %s176
      %p185 = scmp.eq.s32.totalorder %s32, 1
      %p186 = por %p184, %p185
      %p187 = scmp.ne.s32.totalorder %s176, %s177
      %p188 = scmp.eq.s32.totalorder %s32, 0
      %p189 = por %p187, %p188
      %p190 = scmp.ne.s32.totalorder %s176, %s177
      %p191 = scmp.eq.s32.totalorder %s33, 1
      %p192 = por %p190, %p191
      %p194 = scmp.ne.s32.totalorder %s177, %s193
      %p195 = scmp.eq.s32.totalorder %s33, 0
      %p196 = por %p194, %p195
      %s197 = ssub.s32 %s27, %s34
      %p198 = scmp.eq.s32.totalorder %s197, 0
      %s200 = sadd.s32 %s199, 1
      %s201 = scalar_select %p198, %s199, %s200
      %p204 = pneg %p198
      %p205 = scmp.eq.s32.totalorder %s27, 1
      %p206 = por %p204, %p205
      %p207 = scmp.ne.s32.totalorder %s199, %s202
      %p208 = scmp.eq.s32.totalorder %s27, 0
      %p209 = por %p207, %p208
      %p210 = scmp.ne.s32.totalorder %s199, %s202
      %p211 = scmp.eq.s32.totalorder %s32, 1
      %p212 = por %p210, %p211
      %p213 = scmp.ne.s32.totalorder %s202, %s203
      %p214 = scmp.eq.s32.totalorder %s32, 0
      %p215 = por %p213, %p214
      %p216 = scmp.ne.s32.totalorder %s202, %s203
      %p217 = scmp.eq.s32.totalorder %s33, 1
      %p218 = por %p216, %p217
      %p220 = scmp.ne.s32.totalorder %s203, %s219
      %p221 = scmp.eq.s32.totalorder %s33, 0
      %p222 = por %p220, %p221
      %p223 = scmp.le.s32.totalorder 1, %s27
      %p224 = scmp.lt.s32.totalorder %s27, 3
      %p225 = pnand %p223, %p224
      %p226 = pneg %p225
      // Predicated region
      $region9: #{tpu_custom_call.1} parent=5 // pred_check
        _
      $region10: #{tpu_custom_call.1} parent=5 // pred_check_branch
        %228 = sbr.rel (%p225) target = $region12
      $region11: #{tpu_custom_call.1} parent=5 // pred_region
        %s229 = ssub.s32 %s27, 1
        // Predicated region
        $region13: #{tpu_custom_call.1} parent=11 // pred_check
          %p230 = pneg %p100
        $region14: #{tpu_custom_call.1} parent=11 // pred_check_branch
          %232 = sbr.rel (%p230) target = $region16
        $region15: #{tpu_custom_call.1} parent=11 // pred_region
          %234 = vsyncadd [#allocation6], 0
          %s235 = sshll.u32 %s2, 4
          %s236 = int_to_ptr.hbm [resolvable:$true] %s235
          %s237 = sshll.u32 [#allocation7], 4
          %s238 = int_to_ptr.vmem [resolvable:$true] %s237
          %243 = dma.hbm_to_vmem [thread:$0]  %s236, 64, %s238, [#allocation6], 32, 32, 2
        $region16: #{tpu_custom_call.1} parent=11 // pred_fallthru
          _
        // Predicated region
        $region17: #{tpu_custom_call.1} parent=11 // pred_check
          %p244 = pneg %p121
        $region18: #{tpu_custom_call.1} parent=11 // pred_check_branch
          %246 = sbr.rel (%p244) target = $region20
        $region19: #{tpu_custom_call.1} parent=11 // pred_region
          %248 = vsyncadd [#allocation9], 0
          %s249 = sshll.u32 %s3, 4
          %s250 = int_to_ptr.hbm [resolvable:$true] %s249
          %s251 = sshll.u32 [#allocation8], 4
          %s252 = int_to_ptr.vmem [resolvable:$true] %s251
          %257 = dma.hbm_to_vmem [thread:$0]  %s250, 64, %s252, [#allocation9], 32, 32, 2
        $region20: #{tpu_custom_call.1} parent=11 // pred_fallthru
          _
        // Predicated region
        $region21: #{tpu_custom_call.1} parent=11 // pred_check
          %p258 = pneg %p142
        $region22: #{tpu_custom_call.1} parent=11 // pred_check_branch
          %260 = sbr.rel (%p258) target = $region24
        $region23: #{tpu_custom_call.1} parent=11 // pred_region
          _
        $region24: #{tpu_custom_call.1} parent=11 // pred_fallthru
          _
        // Predicated region
        $region25: #{tpu_custom_call.1} parent=11 // pred_check
          %p261 = pneg %p163
        $region26: #{tpu_custom_call.1} parent=11 // pred_check_branch
          %263 = sbr.rel (%p261) target = $region28
        $region27: #{tpu_custom_call.1} parent=11 // pred_region
          _
        $region28: #{tpu_custom_call.1} parent=11 // pred_fallthru
          _
      $region12: #{tpu_custom_call.1} parent=5 // pred_fallthru
        _
      %p264 = scmp.lt.s32.totalorder %s27, 2
      // Predicated region
      $region29: #{tpu_custom_call.1} parent=5 // pred_check
        %p265 = pneg %p264
      $region30: #{tpu_custom_call.1} parent=5 // pred_check_branch
        %267 = sbr.rel (%p265) target = $region32
      $region31: #{tpu_custom_call.1} parent=5 // pred_region
        // Predicated region
        $region33: #{tpu_custom_call.1} parent=31 // pred_check
          %p268 = pneg %p47
        $region34: #{tpu_custom_call.1} parent=31 // pred_check_branch
          %270 = sbr.rel (%p268) target = $region36
        $region35: #{tpu_custom_call.1} parent=31 // pred_region
          %s271 = sand.u32 %s37, 1
          %s272 = scalar_lea.sflag [#allocation3], %s271
          %s273 = sand.u32 %s37, 1
          %s274 = smul.addr %s273, 256
          %s275 = scalar_lea.vmem [#allocation2], %s274
          %s276 = smul.u32 32, %s27
          %278 = vsyncadd %s272, 0
          %s279 = smul.addr %s276, 8
          %s280 = scalar_lea.hbm %s0, %s279
          %s281 = sshll.u32 %s280, 4
          %s282 = int_to_ptr.hbm [resolvable:$true] %s281
          %s283 = sshll.u32 %s275, 4
          %s284 = int_to_ptr.vmem [resolvable:$true] %s283
          %289 = dma.hbm_to_vmem [thread:$0]  %s282, 4096, %s284, %s272, 128, 128, 8
        $region36: #{tpu_custom_call.1} parent=31 // pred_fallthru
          _
        // Predicated region
        $region37: #{tpu_custom_call.1} parent=31 // pred_check
          %p290 = pneg %p73
        $region38: #{tpu_custom_call.1} parent=31 // pred_check_branch
          %292 = sbr.rel (%p290) target = $region40
        $region39: #{tpu_custom_call.1} parent=31 // pred_region
          %s293 = sand.u32 %s27, 1
          %s294 = scalar_lea.sflag [#allocation6], %s293
          %s295 = sand.u32 %s63, 1
          %s296 = smul.addr %s295, 256
          %s297 = scalar_lea.vmem [#allocation5], %s296
          %s298 = smul.u32 32, %s27
          %300 = vsyncadd %s294, 0
          %s301 = smul.addr %s298, 8
          %s302 = scalar_lea.hbm %s1, %s301
          %s303 = sshll.u32 %s302, 4
          %s304 = int_to_ptr.hbm [resolvable:$true] %s303
          %s305 = sshll.u32 %s297, 4
          %s306 = int_to_ptr.vmem [resolvable:$true] %s305
          %311 = dma.hbm_to_vmem [thread:$0]  %s304, 4096, %s306, %s294, 128, 128, 8
        $region40: #{tpu_custom_call.1} parent=31 // pred_fallthru
          _
      $region32: #{tpu_custom_call.1} parent=5 // pred_fallthru
        _
      %p312 = scmp.le.s32.totalorder 1, %s27
      %p313 = scmp.lt.s32.totalorder %s27, 3
      %p314 = pnand %p312, %p313
      %p315 = pneg %p314
      // Predicated region
      $region41: #{tpu_custom_call.1} parent=5 // pred_check
        _
      $region42: #{tpu_custom_call.1} parent=5 // pred_check_branch
        %317 = sbr.rel (%p314) target = $region44
      $region43: #{tpu_custom_call.1} parent=5 // pred_region
        %s318 = ssub.s32 %s27, 1
        %s319 = sand.u32 %s40, 1
        %s320 = scalar_lea.sflag [#allocation3], %s319
        %s321 = sand.u32 %s40, 1
        %s322 = smul.addr %s321, 256
        %s323 = scalar_lea.vmem [#allocation2], %s322
        // Predicated region
        $region45: #{tpu_custom_call.1} parent=43 // pred_check
          %p324 = pneg %p53
        $region46: #{tpu_custom_call.1} parent=43 // pred_check_branch
          %326 = sbr.rel (%p324) target = $region48
        $region47: #{tpu_custom_call.1} parent=43 // pred_region
          %328 = dma.done %s320, 4096
        $region48: #{tpu_custom_call.1} parent=43 // pred_fallthru
          _
        %s329 = sand.u32 %s32, 1
        %s330 = scalar_lea.sflag [#allocation6], %s329
        %s331 = sand.u32 %s66, 1
        %s332 = smul.addr %s331, 256
        %s333 = scalar_lea.vmem [#allocation5], %s332
        // Predicated region
        $region49: #{tpu_custom_call.1} parent=43 // pred_check
          %p334 = pneg %p79
        $region50: #{tpu_custom_call.1} parent=43 // pred_check_branch
          %336 = sbr.rel (%p334) target = $region52
        $region51: #{tpu_custom_call.1} parent=43 // pred_region
          %338 = dma.done %s330, 4096
        $region52: #{tpu_custom_call.1} parent=43 // pred_fallthru
          _
        // Predicated region
        $region53: #{tpu_custom_call.1} parent=43 // pred_check
          %p339 = pneg %p100
        $region54: #{tpu_custom_call.1} parent=43 // pred_check_branch
          %341 = sbr.rel (%p339) target = $region56
        $region55: #{tpu_custom_call.1} parent=43 // pred_region
          %343 = dma.done [#allocation6], 64
        $region56: #{tpu_custom_call.1} parent=43 // pred_fallthru
          _
        // Predicated region
        $region57: #{tpu_custom_call.1} parent=43 // pred_check
          %p344 = pneg %p121
        $region58: #{tpu_custom_call.1} parent=43 // pred_check_branch
          %346 = sbr.rel (%p344) target = $region60
        $region59: #{tpu_custom_call.1} parent=43 // pred_region
          %348 = dma.done [#allocation9], 64
        $region60: #{tpu_custom_call.1} parent=43 // pred_fallthru
          _
        %s349 = sand.u32 %s40, 1
        %s350 = scalar_lea.sflag [#allocation3], %s349
        %s351 = sand.u32 %s40, 1
        %s352 = smul.addr %s351, 256
        %s353 = scalar_lea.vmem [#allocation2], %s352
        %p354 = pneg %p53
        %p355 = pneg %p50
        %s356 = sand.u32 %s32, 1
        %s357 = scalar_lea.sflag [#allocation6], %s356
        %s358 = sand.u32 %s66, 1
        %s359 = smul.addr %s358, 256
        %s360 = scalar_lea.vmem [#allocation5], %s359
        %p361 = pneg %p79
        %p362 = pneg %p76
        %p363 = pneg %p100
        %p364 = pneg %p97
        %p365 = pneg %p121
        %p366 = pneg %p118
        %p367 = pneg %p142
        %p368 = pneg %p139
        %p369 = pneg %p163
        %p370 = pneg %p160
        %p371 = pneg %p189
        %p372 = pneg %p186
        %s373 = sand.u32 %s176, 1
        %s374 = scalar_lea.sflag [#allocation4], %s373
        %s375 = sand.u32 %s176, 1
        %s376 = smul.addr %s375, 256
        %s377 = scalar_lea.vmem [#allocation10], %s376
        %p378 = pneg %p215
        %p379 = pneg %p212
        %s380 = sand.u32 %s202, 1
        %s381 = scalar_lea.sflag [#allocation12], %s380
        %s382 = sand.u32 %s202, 1
        %s383 = smul.addr %s382, 256
        %s384 = scalar_lea.vmem [#allocation11], %s383
        %s385 = smul.u32 32, %s32
        %s386 = smul.u32 32, %s32
        %s387 = smul.u32 32, %s32
        %s388 = smul.u32 32, %s32
        %v389 = vld [vmem:[%s323] sm:$0xff]
        %v390 = vld [vmem:[%s323 + $0x8] sm:$0xff]
        %v391 = vld [vmem:[%s323 + $0x10] sm:$0xff]
        %v392 = vld [vmem:[%s323 + $0x18] sm:$0xff]
        %v393 = vld [vmem:[%s323 + $0x20] sm:$0xff]
        %v394 = vld [vmem:[%s323 + $0x28] sm:$0xff]
        %v395 = vld [vmem:[%s323 + $0x30] sm:$0xff]
        %v396 = vld [vmem:[%s323 + $0x38] sm:$0xff]
        %v397 = vld [vmem:[%s323 + $0x40] sm:$0xff]
        %v398 = vld [vmem:[%s323 + $0x48] sm:$0xff]
        %v399 = vld [vmem:[%s323 + $0x50] sm:$0xff]
        %v400 = vld [vmem:[%s323 + $0x58] sm:$0xff]
        %v401 = vld [vmem:[%s323 + $0x60] sm:$0xff]
        %v402 = vld [vmem:[%s323 + $0x68] sm:$0xff]
        %v403 = vld [vmem:[%s323 + $0x70] sm:$0xff]
        %v404 = vld [vmem:[%s323 + $0x78] sm:$0xff]
        %v405 = vld [vmem:[%s323 + $0x80] sm:$0xff]
        %v406 = vld [vmem:[%s323 + $0x88] sm:$0xff]
        %v407 = vld [vmem:[%s323 + $0x90] sm:$0xff]
        %v408 = vld [vmem:[%s323 + $0x98] sm:$0xff]
        %v409 = vld [vmem:[%s323 + $0xa0] sm:$0xff]
        %v410 = vld [vmem:[%s323 + $0xa8] sm:$0xff]
        %v411 = vld [vmem:[%s323 + $0xb0] sm:$0xff]
        %v412 = vld [vmem:[%s323 + $0xb8] sm:$0xff]
        %v413 = vld [vmem:[%s323 + $0xc0] sm:$0xff]
        %v414 = vld [vmem:[%s323 + $0xc8] sm:$0xff]
        %v415 = vld [vmem:[%s323 + $0xd0] sm:$0xff]
        %v416 = vld [vmem:[%s323 + $0xd8] sm:$0xff]
        %v417 = vld [vmem:[%s323 + $0xe0] sm:$0xff]
        %v418 = vld [vmem:[%s323 + $0xe8] sm:$0xff]
        %v419 = vld [vmem:[%s323 + $0xf0] sm:$0xff]
        %v420 = vld [vmem:[%s323 + $0xf8] sm:$0xff]
        %v421 = vld [vmem:[%s333] sm:$0xff]
        %v422 = vld [vmem:[%s333 + $0x8] sm:$0xff]
        %v423 = vld [vmem:[%s333 + $0x10] sm:$0xff]
        %v424 = vld [vmem:[%s333 + $0x18] sm:$0xff]
        %v425 = vld [vmem:[%s333 + $0x20] sm:$0xff]
        %v426 = vld [vmem:[%s333 + $0x28] sm:$0xff]
        %v427 = vld [vmem:[%s333 + $0x30] sm:$0xff]
        %v428 = vld [vmem:[%s333 + $0x38] sm:$0xff]
        %v429 = vld [vmem:[%s333 + $0x40] sm:$0xff]
        %v430 = vld [vmem:[%s333 + $0x48] sm:$0xff]
        %v431 = vld [vmem:[%s333 + $0x50] sm:$0xff]
        %v432 = vld [vmem:[%s333 + $0x58] sm:$0xff]
        %v433 = vld [vmem:[%s333 + $0x60] sm:$0xff]
        %v434 = vld [vmem:[%s333 + $0x68] sm:$0xff]
        %v435 = vld [vmem:[%s333 + $0x70] sm:$0xff]
        %v436 = vld [vmem:[%s333 + $0x78] sm:$0xff]
        %v437 = vld [vmem:[%s333 + $0x80] sm:$0xff]
        %v438 = vld [vmem:[%s333 + $0x88] sm:$0xff]
        %v439 = vld [vmem:[%s333 + $0x90] sm:$0xff]
        %v440 = vld [vmem:[%s333 + $0x98] sm:$0xff]
        %v441 = vld [vmem:[%s333 + $0xa0] sm:$0xff]
        %v442 = vld [vmem:[%s333 + $0xa8] sm:$0xff]
        %v443 = vld [vmem:[%s333 + $0xb0] sm:$0xff]
        %v444 = vld [vmem:[%s333 + $0xb8] sm:$0xff]
        %v445 = vld [vmem:[%s333 + $0xc0] sm:$0xff]
        %v446 = vld [vmem:[%s333 + $0xc8] sm:$0xff]
        %v447 = vld [vmem:[%s333 + $0xd0] sm:$0xff]
        %v448 = vld [vmem:[%s333 + $0xd8] sm:$0xff]
        %v449 = vld [vmem:[%s333 + $0xe0] sm:$0xff]
        %v450 = vld [vmem:[%s333 + $0xe8] sm:$0xff]
        %v451 = vld [vmem:[%s333 + $0xf0] sm:$0xff]
        %v452 = vld [vmem:[%s333 + $0xf8] sm:$0xff]
        %v453 = vld [vmem:[#allocation7] sm:$0x3]
        %v454 = vld [vmem:[#allocation7 + $0x2] sm:$0x3]
        %v455 = vld [vmem:[#allocation8] sm:$0x3]
        %v456 = vld [vmem:[#allocation8 + $0x2] sm:$0x3]
        %v457 = vld [vmem:[%s4] sm:$0x3]
        %v458 = vld [vmem:[%s5] sm:$0x3]
        %459 = vmatpush.xpose.msra.mxu0 0.0
        %460 = vmatpush.xpose.msra.mxu0 0.0
        %461 = vmatpush.xpose.msra.mxu0 0.0
        %462 = vmatpush.xpose.msra.mxu0 0.0
        %463 = vmatpush.xpose.msra.mxu0 0.0
        %464 = vmatpush.xpose.msra.mxu0 0.0
        %465 = vmatpush.xpose.msra.mxu0 0.0
        %466 = vmatpush.xpose.msra.mxu0 0.0
        %467 = vmatpush.xpose.msra.mxu0 0.0
        %468 = vmatpush.xpose.msra.mxu0 0.0
        %469 = vmatpush.xpose.msra.mxu0 0.0
        %470 = vmatpush.xpose.msra.mxu0 0.0
        %471 = vmatpush.xpose.msra.mxu0 0.0
        %472 = vmatpush.xpose.msra.mxu0 0.0
        %473 = vmatpush.xpose.msra.mxu0 0.0
        %474 = vmatpush.xpose.msra.mxu0 %v453
        %475 = vmatmul.f32.gmra.mxu0 %v421
        %v476 = vpop.f32.mrf.mxu0
        %v477 = vadd.f32 0.0, %v476
        %478 = vmatmul.f32.gmra.mxu0 %v422
        %v479 = vpop.f32.mrf.mxu0
        %v480 = vadd.f32 0.0, %v479
        %481 = vmatmul.f32.gmra.mxu0 %v423
        %v482 = vpop.f32.mrf.mxu0
        %v483 = vadd.f32 0.0, %v482
        %484 = vmatmul.f32.gmra.mxu0 %v424
        %v485 = vpop.f32.mrf.mxu0
        %v486 = vadd.f32 0.0, %v485
        %487 = vmatmul.f32.gmra.mxu0 %v425
        %v488 = vpop.f32.mrf.mxu0
        %v489 = vadd.f32 0.0, %v488
        %490 = vmatmul.f32.gmra.mxu0 %v426
        %v491 = vpop.f32.mrf.mxu0
        %v492 = vadd.f32 0.0, %v491
        %493 = vmatmul.f32.gmra.mxu0 %v427
        %v494 = vpop.f32.mrf.mxu0
        %v495 = vadd.f32 0.0, %v494
        %496 = vmatmul.f32.gmra.mxu0 %v428
        %v497 = vpop.f32.mrf.mxu0
        %v498 = vadd.f32 0.0, %v497
        %499 = vmatmul.f32.gmra.mxu0 %v429
        %v500 = vpop.f32.mrf.mxu0
        %v501 = vadd.f32 0.0, %v500
        %502 = vmatmul.f32.gmra.mxu0 %v430
        %v503 = vpop.f32.mrf.mxu0
        %v504 = vadd.f32 0.0, %v503
        %505 = vmatmul.f32.gmra.mxu0 %v431
        %v506 = vpop.f32.mrf.mxu0
        %v507 = vadd.f32 0.0, %v506
        %508 = vmatmul.f32.gmra.mxu0 %v432
        %v509 = vpop.f32.mrf.mxu0
        %v510 = vadd.f32 0.0, %v509
        %511 = vmatmul.f32.gmra.mxu0 %v433
        %v512 = vpop.f32.mrf.mxu0
        %v513 = vadd.f32 0.0, %v512
        %514 = vmatmul.f32.gmra.mxu0 %v434
        %v515 = vpop.f32.mrf.mxu0
        %v516 = vadd.f32 0.0, %v515
        %517 = vmatmul.f32.gmra.mxu0 %v435
        %v518 = vpop.f32.mrf.mxu0
        %v519 = vadd.f32 0.0, %v518
        %520 = vmatmul.f32.gmra.mxu0 %v436
        %v521 = vpop.f32.mrf.mxu0
        %v522 = vadd.f32 0.0, %v521
        %523 = vmatmul.f32.gmra.mxu0 %v437
        %v524 = vpop.f32.mrf.mxu0
        %v525 = vadd.f32 0.0, %v524
        %526 = vmatmul.f32.gmra.mxu0 %v438
        %v527 = vpop.f32.mrf.mxu0
        %v528 = vadd.f32 0.0, %v527
        %529 = vmatmul.f32.gmra.mxu0 %v439
        %v530 = vpop.f32.mrf.mxu0
        %v531 = vadd.f32 0.0, %v530
        %532 = vmatmul.f32.gmra.mxu0 %v440
        %v533 = vpop.f32.mrf.mxu0
        %v534 = vadd.f32 0.0, %v533
        %535 = vmatmul.f32.gmra.mxu0 %v441
        %v536 = vpop.f32.mrf.mxu0
        %v537 = vadd.f32 0.0, %v536
        %538 = vmatmul.f32.gmra.mxu0 %v442
        %v539 = vpop.f32.mrf.mxu0
        %v540 = vadd.f32 0.0, %v539
        %541 = vmatmul.f32.gmra.mxu0 %v443
        %v542 = vpop.f32.mrf.mxu0
        %v543 = vadd.f32 0.0, %v542
        %544 = vmatmul.f32.gmra.mxu0 %v444
        %v545 = vpop.f32.mrf.mxu0
        %v546 = vadd.f32 0.0, %v545
        %547 = vmatmul.f32.gmra.mxu0 %v445
        %v548 = vpop.f32.mrf.mxu0
        %v549 = vadd.f32 0.0, %v548
        %550 = vmatmul.f32.gmra.mxu0 %v446
        %v551 = vpop.f32.mrf.mxu0
        %v552 = vadd.f32 0.0, %v551
        %553 = vmatmul.f32.gmra.mxu0 %v447
        %v554 = vpop.f32.mrf.mxu0
        %v555 = vadd.f32 0.0, %v554
        %556 = vmatmul.f32.gmra.mxu0 %v448
        %v557 = vpop.f32.mrf.mxu0
        %v558 = vadd.f32 0.0, %v557
        %559 = vmatmul.f32.gmra.mxu0 %v449
        %v560 = vpop.f32.mrf.mxu0
        %v561 = vadd.f32 0.0, %v560
        %562 = vmatmul.f32.gmra.mxu0 %v450
        %v563 = vpop.f32.mrf.mxu0
        %v564 = vadd.f32 0.0, %v563
        %565 = vmatmul.f32.gmra.mxu0 %v451
        %v566 = vpop.f32.mrf.mxu0
        %v567 = vadd.f32 0.0, %v566
        %568 = vmatmul.f32.gmra.mxu0 %v452
        %v569 = vpop.f32.mrf.mxu0
        %v570 = vadd.f32 0.0, %v569
        %571 = vdwg.mxu0
        %572 = vmatpush.xpose.msra.mxu0 0.0
        %573 = vmatpush.xpose.msra.mxu0 0.0
        %574 = vmatpush.xpose.msra.mxu0 0.0
        %575 = vmatpush.xpose.msra.mxu0 0.0
        %576 = vmatpush.xpose.msra.mxu0 0.0
        %577 = vmatpush.xpose.msra.mxu0 0.0
        %578 = vmatpush.xpose.msra.mxu0 0.0
        %579 = vmatpush.xpose.msra.mxu0 0.0
        %580 = vmatpush.xpose.msra.mxu0 0.0
        %581 = vmatpush.xpose.msra.mxu0 0.0
        %582 = vmatpush.xpose.msra.mxu0 0.0
        %583 = vmatpush.xpose.msra.mxu0 0.0
        %584 = vmatpush.xpose.msra.mxu0 0.0
        %585 = vmatpush.xpose.msra.mxu0 0.0
        %586 = vmatpush.xpose.msra.mxu0 0.0
        %587 = vmatpush.xpose.msra.mxu0 %v455
        %588 = vmatmul.f32.gmra.mxu0 %v389
        %v589 = vpop.f32.mrf.mxu0
        %v590 = vadd.f32 0.0, %v589
        %591 = vmatmul.f32.gmra.mxu0 %v390
        %v592 = vpop.f32.mrf.mxu0
        %v593 = vadd.f32 0.0, %v592
        %594 = vmatmul.f32.gmra.mxu0 %v391
        %v595 = vpop.f32.mrf.mxu0
        %v596 = vadd.f32 0.0, %v595
        %597 = vmatmul.f32.gmra.mxu0 %v392
        %v598 = vpop.f32.mrf.mxu0
        %v599 = vadd.f32 0.0, %v598
        %600 = vmatmul.f32.gmra.mxu0 %v393
        %v601 = vpop.f32.mrf.mxu0
        %v602 = vadd.f32 0.0, %v601
        %603 = vmatmul.f32.gmra.mxu0 %v394
        %v604 = vpop.f32.mrf.mxu0
        %v605 = vadd.f32 0.0, %v604
        %606 = vmatmul.f32.gmra.mxu0 %v395
        %v607 = vpop.f32.mrf.mxu0
        %v608 = vadd.f32 0.0, %v607
        %609 = vmatmul.f32.gmra.mxu0 %v396
        %v610 = vpop.f32.mrf.mxu0
        %v611 = vadd.f32 0.0, %v610
        %612 = vmatmul.f32.gmra.mxu0 %v397
        %v613 = vpop.f32.mrf.mxu0
        %v614 = vadd.f32 0.0, %v613
        %615 = vmatmul.f32.gmra.mxu0 %v398
        %v616 = vpop.f32.mrf.mxu0
        %v617 = vadd.f32 0.0, %v616
        %618 = vmatmul.f32.gmra.mxu0 %v399
        %v619 = vpop.f32.mrf.mxu0
        %v620 = vadd.f32 0.0, %v619
        %621 = vmatmul.f32.gmra.mxu0 %v400
        %v622 = vpop.f32.mrf.mxu0
        %v623 = vadd.f32 0.0, %v622
        %624 = vmatmul.f32.gmra.mxu0 %v401
        %v625 = vpop.f32.mrf.mxu0
        %v626 = vadd.f32 0.0, %v625
        %627 = vmatmul.f32.gmra.mxu0 %v402
        %v628 = vpop.f32.mrf.mxu0
        %v629 = vadd.f32 0.0, %v628
        %630 = vmatmul.f32.gmra.mxu0 %v403
        %v631 = vpop.f32.mrf.mxu0
        %v632 = vadd.f32 0.0, %v631
        %633 = vmatmul.f32.gmra.mxu0 %v404
        %v634 = vpop.f32.mrf.mxu0
        %v635 = vadd.f32 0.0, %v634
        %636 = vmatmul.f32.gmra.mxu0 %v405
        %v637 = vpop.f32.mrf.mxu0
        %v638 = vadd.f32 0.0, %v637
        %639 = vmatmul.f32.gmra.mxu0 %v406
        %v640 = vpop.f32.mrf.mxu0
        %v641 = vadd.f32 0.0, %v640
        %642 = vmatmul.f32.gmra.mxu0 %v407
        %v643 = vpop.f32.mrf.mxu0
        %v644 = vadd.f32 0.0, %v643
        %645 = vmatmul.f32.gmra.mxu0 %v408
        %v646 = vpop.f32.mrf.mxu0
        %v647 = vadd.f32 0.0, %v646
        %648 = vmatmul.f32.gmra.mxu0 %v409
        %v649 = vpop.f32.mrf.mxu0
        %v650 = vadd.f32 0.0, %v649
        %651 = vmatmul.f32.gmra.mxu0 %v410
        %v652 = vpop.f32.mrf.mxu0
        %v653 = vadd.f32 0.0, %v652
        %654 = vmatmul.f32.gmra.mxu0 %v411
        %v655 = vpop.f32.mrf.mxu0
        %v656 = vadd.f32 0.0, %v655
        %657 = vmatmul.f32.gmra.mxu0 %v412
        %v658 = vpop.f32.mrf.mxu0
        %v659 = vadd.f32 0.0, %v658
        %660 = vmatmul.f32.gmra.mxu0 %v413
        %v661 = vpop.f32.mrf.mxu0
        %v662 = vadd.f32 0.0, %v661
        %663 = vmatmul.f32.gmra.mxu0 %v414
        %v664 = vpop.f32.mrf.mxu0
        %v665 = vadd.f32 0.0, %v664
        %666 = vmatmul.f32.gmra.mxu0 %v415
        %v667 = vpop.f32.mrf.mxu0
        %v668 = vadd.f32 0.0, %v667
        %669 = vmatmul.f32.gmra.mxu0 %v416
        %v670 = vpop.f32.mrf.mxu0
        %v671 = vadd.f32 0.0, %v670
        %672 = vmatmul.f32.gmra.mxu0 %v417
        %v673 = vpop.f32.mrf.mxu0
        %v674 = vadd.f32 0.0, %v673
        %675 = vmatmul.f32.gmra.mxu0 %v418
        %v676 = vpop.f32.mrf.mxu0
        %v677 = vadd.f32 0.0, %v676
        %678 = vmatmul.f32.gmra.mxu0 %v419
        %v679 = vpop.f32.mrf.mxu0
        %v680 = vadd.f32 0.0, %v679
        %681 = vmatmul.f32.gmra.mxu0 %v420
        %v682 = vpop.f32.mrf.mxu0
        %v683 = vadd.f32 0.0, %v682
        %684 = vdwg.mxu0
        %686 = vset.pattern.permute.xlu0 0
        %687 = vperm.xlu0 %686, %v477
        %v688 = vpop.permute.xlu0 %687
        %691 = vset.pattern.permute.xlu0 0
        %692 = vperm.xlu0 %691, %v480
        %v693 = vpop.permute.xlu0 %692
        %696 = vset.pattern.permute.xlu0 0
        %697 = vperm.xlu0 %696, %v483
        %v698 = vpop.permute.xlu0 %697
        %701 = vset.pattern.permute.xlu0 0
        %702 = vperm.xlu0 %701, %v486
        %v703 = vpop.permute.xlu0 %702
        %706 = vset.pattern.permute.xlu0 0
        %707 = vperm.xlu0 %706, %v489
        %v708 = vpop.permute.xlu0 %707
        %711 = vset.pattern.permute.xlu0 0
        %712 = vperm.xlu0 %711, %v492
        %v713 = vpop.permute.xlu0 %712
        %716 = vset.pattern.permute.xlu0 0
        %717 = vperm.xlu0 %716, %v495
        %v718 = vpop.permute.xlu0 %717
        %721 = vset.pattern.permute.xlu0 0
        %722 = vperm.xlu0 %721, %v498
        %v723 = vpop.permute.xlu0 %722
        %726 = vset.pattern.permute.xlu0 0
        %727 = vperm.xlu0 %726, %v501
        %v728 = vpop.permute.xlu0 %727
        %731 = vset.pattern.permute.xlu0 0
        %732 = vperm.xlu0 %731, %v504
        %v733 = vpop.permute.xlu0 %732
        %736 = vset.pattern.permute.xlu0 0
        %737 = vperm.xlu0 %736, %v507
        %v738 = vpop.permute.xlu0 %737
        %741 = vset.pattern.permute.xlu0 0
        %742 = vperm.xlu0 %741, %v510
        %v743 = vpop.permute.xlu0 %742
        %746 = vset.pattern.permute.xlu0 0
        %747 = vperm.xlu0 %746, %v513
        %v748 = vpop.permute.xlu0 %747
        %751 = vset.pattern.permute.xlu0 0
        %752 = vperm.xlu0 %751, %v516
        %v753 = vpop.permute.xlu0 %752
        %756 = vset.pattern.permute.xlu0 0
        %757 = vperm.xlu0 %756, %v519
        %v758 = vpop.permute.xlu0 %757
        %761 = vset.pattern.permute.xlu0 0
        %762 = vperm.xlu0 %761, %v522
        %v763 = vpop.permute.xlu0 %762
        %766 = vset.pattern.permute.xlu0 0
        %767 = vperm.xlu0 %766, %v525
        %v768 = vpop.permute.xlu0 %767
        %771 = vset.pattern.permute.xlu0 0
        %772 = vperm.xlu0 %771, %v528
        %v773 = vpop.permute.xlu0 %772
        %776 = vset.pattern.permute.xlu0 0
        %777 = vperm.xlu0 %776, %v531
        %v778 = vpop.permute.xlu0 %777
        %781 = vset.pattern.permute.xlu0 0
        %782 = vperm.xlu0 %781, %v534
        %v783 = vpop.permute.xlu0 %782
        %786 = vset.pattern.permute.xlu0 0
        %787 = vperm.xlu0 %786, %v537
        %v788 = vpop.permute.xlu0 %787
        %791 = vset.pattern.permute.xlu0 0
        %792 = vperm.xlu0 %791, %v540
        %v793 = vpop.permute.xlu0 %792
        %796 = vset.pattern.permute.xlu0 0
        %797 = vperm.xlu0 %796, %v543
        %v798 = vpop.permute.xlu0 %797
        %801 = vset.pattern.permute.xlu0 0
        %802 = vperm.xlu0 %801, %v546
        %v803 = vpop.permute.xlu0 %802
        %806 = vset.pattern.permute.xlu0 0
        %807 = vperm.xlu0 %806, %v549
        %v808 = vpop.permute.xlu0 %807
        %811 = vset.pattern.permute.xlu0 0
        %812 = vperm.xlu0 %811, %v552
        %v813 = vpop.permute.xlu0 %812
        %816 = vset.pattern.permute.xlu0 0
        %817 = vperm.xlu0 %816, %v555
        %v818 = vpop.permute.xlu0 %817
        %821 = vset.pattern.permute.xlu0 0
        %822 = vperm.xlu0 %821, %v558
        %v823 = vpop.permute.xlu0 %822
        %826 = vset.pattern.permute.xlu0 0
        %827 = vperm.xlu0 %826, %v561
        %v828 = vpop.permute.xlu0 %827
        %831 = vset.pattern.permute.xlu0 0
        %832 = vperm.xlu0 %831, %v564
        %v833 = vpop.permute.xlu0 %832
        %836 = vset.pattern.permute.xlu0 0
        %837 = vperm.xlu0 %836, %v567
        %v838 = vpop.permute.xlu0 %837
        %841 = vset.pattern.permute.xlu0 0
        %842 = vperm.xlu0 %841, %v570
        %v843 = vpop.permute.xlu0 %842
        %v845 = vmul.f32 %v389, %v688
        %v846 = vmul.f32 %v390, %v693
        %v847 = vmul.f32 %v391, %v698
        %v848 = vmul.f32 %v392, %v703
        %v849 = vmul.f32 %v393, %v708
        %v850 = vmul.f32 %v394, %v713
        %v851 = vmul.f32 %v395, %v718
        %v852 = vmul.f32 %v396, %v723
        %v853 = vmul.f32 %v397, %v728
        %v854 = vmul.f32 %v398, %v733
        %v855 = vmul.f32 %v399, %v738
        %v856 = vmul.f32 %v400, %v743
        %v857 = vmul.f32 %v401, %v748
        %v858 = vmul.f32 %v402, %v753
        %v859 = vmul.f32 %v403, %v758
        %v860 = vmul.f32 %v404, %v763
        %v861 = vmul.f32 %v405, %v768
        %v862 = vmul.f32 %v406, %v773
        %v863 = vmul.f32 %v407, %v778
        %v864 = vmul.f32 %v408, %v783
        %v865 = vmul.f32 %v409, %v788
        %v866 = vmul.f32 %v410, %v793
        %v867 = vmul.f32 %v411, %v798
        %v868 = vmul.f32 %v412, %v803
        %v869 = vmul.f32 %v413, %v808
        %v870 = vmul.f32 %v414, %v813
        %v871 = vmul.f32 %v415, %v818
        %v872 = vmul.f32 %v416, %v823
        %v873 = vmul.f32 %v417, %v828
        %v874 = vmul.f32 %v418, %v833
        %v875 = vmul.f32 %v419, %v838
        %v876 = vmul.f32 %v420, %v843
        %878 = vset.pattern.permute.xlu0 0
        %879 = vperm.xlu0 %878, %v590
        %v880 = vpop.permute.xlu0 %879
        %883 = vset.pattern.permute.xlu0 0
        %884 = vperm.xlu0 %883, %v593
        %v885 = vpop.permute.xlu0 %884
        %888 = vset.pattern.permute.xlu0 0
        %889 = vperm.xlu0 %888, %v596
        %v890 = vpop.permute.xlu0 %889
        %893 = vset.pattern.permute.xlu0 0
        %894 = vperm.xlu0 %893, %v599
        %v895 = vpop.permute.xlu0 %894
        %898 = vset.pattern.permute.xlu0 0
        %899 = vperm.xlu0 %898, %v602
        %v900 = vpop.permute.xlu0 %899
        %903 = vset.pattern.permute.xlu0 0
        %904 = vperm.xlu0 %903, %v605
        %v905 = vpop.permute.xlu0 %904
        %908 = vset.pattern.permute.xlu0 0
        %909 = vperm.xlu0 %908, %v608
        %v910 = vpop.permute.xlu0 %909
        %913 = vset.pattern.permute.xlu0 0
        %914 = vperm.xlu0 %913, %v611
        %v915 = vpop.permute.xlu0 %914
        %918 = vset.pattern.permute.xlu0 0
        %919 = vperm.xlu0 %918, %v614
        %v920 = vpop.permute.xlu0 %919
        %923 = vset.pattern.permute.xlu0 0
        %924 = vperm.xlu0 %923, %v617
        %v925 = vpop.permute.xlu0 %924
        %928 = vset.pattern.permute.xlu0 0
        %929 = vperm.xlu0 %928, %v620
        %v930 = vpop.permute.xlu0 %929
        %933 = vset.pattern.permute.xlu0 0
        %934 = vperm.xlu0 %933, %v623
        %v935 = vpop.permute.xlu0 %934
        %938 = vset.pattern.permute.xlu0 0
        %939 = vperm.xlu0 %938, %v626
        %v940 = vpop.permute.xlu0 %939
        %943 = vset.pattern.permute.xlu0 0
        %944 = vperm.xlu0 %943, %v629
        %v945 = vpop.permute.xlu0 %944
        %948 = vset.pattern.permute.xlu0 0
        %949 = vperm.xlu0 %948, %v632
        %v950 = vpop.permute.xlu0 %949
        %953 = vset.pattern.permute.xlu0 0
        %954 = vperm.xlu0 %953, %v635
        %v955 = vpop.permute.xlu0 %954
        %958 = vset.pattern.permute.xlu0 0
        %959 = vperm.xlu0 %958, %v638
        %v960 = vpop.permute.xlu0 %959
        %963 = vset.pattern.permute.xlu0 0
        %964 = vperm.xlu0 %963, %v641
        %v965 = vpop.permute.xlu0 %964
        %968 = vset.pattern.permute.xlu0 0
        %969 = vperm.xlu0 %968, %v644
        %v970 = vpop.permute.xlu0 %969
        %973 = vset.pattern.permute.xlu0 0
        %974 = vperm.xlu0 %973, %v647
        %v975 = vpop.permute.xlu0 %974
        %978 = vset.pattern.permute.xlu0 0
        %979 = vperm.xlu0 %978, %v650
        %v980 = vpop.permute.xlu0 %979
        %983 = vset.pattern.permute.xlu0 0
        %984 = vperm.xlu0 %983, %v653
        %v985 = vpop.permute.xlu0 %984
        %988 = vset.pattern.permute.xlu0 0
        %989 = vperm.xlu0 %988, %v656
        %v990 = vpop.permute.xlu0 %989
        %993 = vset.pattern.permute.xlu0 0
        %994 = vperm.xlu0 %993, %v659
        %v995 = vpop.permute.xlu0 %994
        %998 = vset.pattern.permute.xlu0 0
        %999 = vperm.xlu0 %998, %v662
        %v1000 = vpop.permute.xlu0 %999
        %1003 = vset.pattern.permute.xlu0 0
        %1004 = vperm.xlu0 %1003, %v665
        %v1005 = vpop.permute.xlu0 %1004
        %1008 = vset.pattern.permute.xlu0 0
        %1009 = vperm.xlu0 %1008, %v668
        %v1010 = vpop.permute.xlu0 %1009
        %1013 = vset.pattern.permute.xlu0 0
        %1014 = vperm.xlu0 %1013, %v671
        %v1015 = vpop.permute.xlu0 %1014
        %1018 = vset.pattern.permute.xlu0 0
        %1019 = vperm.xlu0 %1018, %v674
        %v1020 = vpop.permute.xlu0 %1019
        %1023 = vset.pattern.permute.xlu0 0
        %1024 = vperm.xlu0 %1023, %v677
        %v1025 = vpop.permute.xlu0 %1024
        %1028 = vset.pattern.permute.xlu0 0
        %1029 = vperm.xlu0 %1028, %v680
        %v1030 = vpop.permute.xlu0 %1029
        %1033 = vset.pattern.permute.xlu0 0
        %1034 = vperm.xlu0 %1033, %v683
        %v1035 = vpop.permute.xlu0 %1034
        %v1037 = vmul.f32 %v421, %v880
        %v1038 = vmul.f32 %v422, %v885
        %v1039 = vmul.f32 %v423, %v890
        %v1040 = vmul.f32 %v424, %v895
        %v1041 = vmul.f32 %v425, %v900
        %v1042 = vmul.f32 %v426, %v905
        %v1043 = vmul.f32 %v427, %v910
        %v1044 = vmul.f32 %v428, %v915
        %v1045 = vmul.f32 %v429, %v920
        %v1046 = vmul.f32 %v430, %v925
        %v1047 = vmul.f32 %v431, %v930
        %v1048 = vmul.f32 %v432, %v935
        %v1049 = vmul.f32 %v433, %v940
        %v1050 = vmul.f32 %v434, %v945
        %v1051 = vmul.f32 %v435, %v950
        %v1052 = vmul.f32 %v436, %v955
        %v1053 = vmul.f32 %v437, %v960
        %v1054 = vmul.f32 %v438, %v965
        %v1055 = vmul.f32 %v439, %v970
        %v1056 = vmul.f32 %v440, %v975
        %v1057 = vmul.f32 %v441, %v980
        %v1058 = vmul.f32 %v442, %v985
        %v1059 = vmul.f32 %v443, %v990
        %v1060 = vmul.f32 %v444, %v995
        %v1061 = vmul.f32 %v445, %v1000
        %v1062 = vmul.f32 %v446, %v1005
        %v1063 = vmul.f32 %v447, %v1010
        %v1064 = vmul.f32 %v448, %v1015
        %v1065 = vmul.f32 %v449, %v1020
        %v1066 = vmul.f32 %v450, %v1025
        %v1067 = vmul.f32 %v451, %v1030
        %v1068 = vmul.f32 %v452, %v1035
        %v1069 = vadd.f32 %v845, %v1037
        %v1070 = vadd.f32 %v846, %v1038
        %v1071 = vadd.f32 %v847, %v1039
        %v1072 = vadd.f32 %v848, %v1040
        %v1073 = vadd.f32 %v849, %v1041
        %v1074 = vadd.f32 %v850, %v1042
        %v1075 = vadd.f32 %v851, %v1043
        %v1076 = vadd.f32 %v852, %v1044
        %v1077 = vadd.f32 %v853, %v1045
        %v1078 = vadd.f32 %v854, %v1046
        %v1079 = vadd.f32 %v855, %v1047
        %v1080 = vadd.f32 %v856, %v1048
        %v1081 = vadd.f32 %v857, %v1049
        %v1082 = vadd.f32 %v858, %v1050
        %v1083 = vadd.f32 %v859, %v1051
        %v1084 = vadd.f32 %v860, %v1052
        %v1085 = vadd.f32 %v861, %v1053
        %v1086 = vadd.f32 %v862, %v1054
        %v1087 = vadd.f32 %v863, %v1055
        %v1088 = vadd.f32 %v864, %v1056
        %v1089 = vadd.f32 %v865, %v1057
        %v1090 = vadd.f32 %v866, %v1058
        %v1091 = vadd.f32 %v867, %v1059
        %v1092 = vadd.f32 %v868, %v1060
        %v1093 = vadd.f32 %v869, %v1061
        %v1094 = vadd.f32 %v870, %v1062
        %v1095 = vadd.f32 %v871, %v1063
        %v1096 = vadd.f32 %v872, %v1064
        %v1097 = vadd.f32 %v873, %v1065
        %v1098 = vadd.f32 %v874, %v1066
        %v1099 = vadd.f32 %v875, %v1067
        %v1100 = vadd.f32 %v876, %v1068
        %v1101 = vperm.slane %v457, 0
        %v1102 = vadd.f32 %v1069, %v1101
        %v1103 = vadd.f32 %v1070, %v1101
        %v1104 = vadd.f32 %v1071, %v1101
        %v1105 = vadd.f32 %v1072, %v1101
        %v1106 = vadd.f32 %v1073, %v1101
        %v1107 = vadd.f32 %v1074, %v1101
        %v1108 = vadd.f32 %v1075, %v1101
        %v1109 = vadd.f32 %v1076, %v1101
        %v1110 = vadd.f32 %v1077, %v1101
        %v1111 = vadd.f32 %v1078, %v1101
        %v1112 = vadd.f32 %v1079, %v1101
        %v1113 = vadd.f32 %v1080, %v1101
        %v1114 = vadd.f32 %v1081, %v1101
        %v1115 = vadd.f32 %v1082, %v1101
        %v1116 = vadd.f32 %v1083, %v1101
        %v1117 = vadd.f32 %v1084, %v1101
        %v1118 = vadd.f32 %v1085, %v1101
        %v1119 = vadd.f32 %v1086, %v1101
        %v1120 = vadd.f32 %v1087, %v1101
        %v1121 = vadd.f32 %v1088, %v1101
        %v1122 = vadd.f32 %v1089, %v1101
        %v1123 = vadd.f32 %v1090, %v1101
        %v1124 = vadd.f32 %v1091, %v1101
        %v1125 = vadd.f32 %v1092, %v1101
        %v1126 = vadd.f32 %v1093, %v1101
        %v1127 = vadd.f32 %v1094, %v1101
        %v1128 = vadd.f32 %v1095, %v1101
        %v1129 = vadd.f32 %v1096, %v1101
        %v1130 = vadd.f32 %v1097, %v1101
        %v1131 = vadd.f32 %v1098, %v1101
        %v1132 = vadd.f32 %v1099, %v1101
        %v1133 = vadd.f32 %v1100, %v1101
        %1134 = vset.pattern.permute.xlu0 1
        %1135 = vperm.xlu0 %1134, %v477
        %v1136 = vpop.permute.xlu0 %1135
        %1138 = vset.pattern.permute.xlu0 1
        %1139 = vperm.xlu0 %1138, %v480
        %v1140 = vpop.permute.xlu0 %1139
        %1142 = vset.pattern.permute.xlu0 1
        %1143 = vperm.xlu0 %1142, %v483
        %v1144 = vpop.permute.xlu0 %1143
        %1146 = vset.pattern.permute.xlu0 1
        %1147 = vperm.xlu0 %1146, %v486
        %v1148 = vpop.permute.xlu0 %1147
        %1150 = vset.pattern.permute.xlu0 1
        %1151 = vperm.xlu0 %1150, %v489
        %v1152 = vpop.permute.xlu0 %1151
        %1154 = vset.pattern.permute.xlu0 1
        %1155 = vperm.xlu0 %1154, %v492
        %v1156 = vpop.permute.xlu0 %1155
        %1158 = vset.pattern.permute.xlu0 1
        %1159 = vperm.xlu0 %1158, %v495
        %v1160 = vpop.permute.xlu0 %1159
        %1162 = vset.pattern.permute.xlu0 1
        %1163 = vperm.xlu0 %1162, %v498
        %v1164 = vpop.permute.xlu0 %1163
        %1166 = vset.pattern.permute.xlu0 1
        %1167 = vperm.xlu0 %1166, %v501
        %v1168 = vpop.permute.xlu0 %1167
        %1170 = vset.pattern.permute.xlu0 1
        %1171 = vperm.xlu0 %1170, %v504
        %v1172 = vpop.permute.xlu0 %1171
        %1174 = vset.pattern.permute.xlu0 1
        %1175 = vperm.xlu0 %1174, %v507
        %v1176 = vpop.permute.xlu0 %1175
        %1178 = vset.pattern.permute.xlu0 1
        %1179 = vperm.xlu0 %1178, %v510
        %v1180 = vpop.permute.xlu0 %1179
        %1182 = vset.pattern.permute.xlu0 1
        %1183 = vperm.xlu0 %1182, %v513
        %v1184 = vpop.permute.xlu0 %1183
        %1186 = vset.pattern.permute.xlu0 1
        %1187 = vperm.xlu0 %1186, %v516
        %v1188 = vpop.permute.xlu0 %1187
        %1190 = vset.pattern.permute.xlu0 1
        %1191 = vperm.xlu0 %1190, %v519
        %v1192 = vpop.permute.xlu0 %1191
        %1194 = vset.pattern.permute.xlu0 1
        %1195 = vperm.xlu0 %1194, %v522
        %v1196 = vpop.permute.xlu0 %1195
        %1198 = vset.pattern.permute.xlu0 1
        %1199 = vperm.xlu0 %1198, %v525
        %v1200 = vpop.permute.xlu0 %1199
        %1202 = vset.pattern.permute.xlu0 1
        %1203 = vperm.xlu0 %1202, %v528
        %v1204 = vpop.permute.xlu0 %1203
        %1206 = vset.pattern.permute.xlu0 1
        %1207 = vperm.xlu0 %1206, %v531
        %v1208 = vpop.permute.xlu0 %1207
        %1210 = vset.pattern.permute.xlu0 1
        %1211 = vperm.xlu0 %1210, %v534
        %v1212 = vpop.permute.xlu0 %1211
        %1214 = vset.pattern.permute.xlu0 1
        %1215 = vperm.xlu0 %1214, %v537
        %v1216 = vpop.permute.xlu0 %1215
        %1218 = vset.pattern.permute.xlu0 1
        %1219 = vperm.xlu0 %1218, %v540
        %v1220 = vpop.permute.xlu0 %1219
        %1222 = vset.pattern.permute.xlu0 1
        %1223 = vperm.xlu0 %1222, %v543
        %v1224 = vpop.permute.xlu0 %1223
        %1226 = vset.pattern.permute.xlu0 1
        %1227 = vperm.xlu0 %1226, %v546
        %v1228 = vpop.permute.xlu0 %1227
        %1230 = vset.pattern.permute.xlu0 1
        %1231 = vperm.xlu0 %1230, %v549
        %v1232 = vpop.permute.xlu0 %1231
        %1234 = vset.pattern.permute.xlu0 1
        %1235 = vperm.xlu0 %1234, %v552
        %v1236 = vpop.permute.xlu0 %1235
        %1238 = vset.pattern.permute.xlu0 1
        %1239 = vperm.xlu0 %1238, %v555
        %v1240 = vpop.permute.xlu0 %1239
        %1242 = vset.pattern.permute.xlu0 1
        %1243 = vperm.xlu0 %1242, %v558
        %v1244 = vpop.permute.xlu0 %1243
        %1246 = vset.pattern.permute.xlu0 1
        %1247 = vperm.xlu0 %1246, %v561
        %v1248 = vpop.permute.xlu0 %1247
        %1250 = vset.pattern.permute.xlu0 1
        %1251 = vperm.xlu0 %1250, %v564
        %v1252 = vpop.permute.xlu0 %1251
        %1254 = vset.pattern.permute.xlu0 1
        %1255 = vperm.xlu0 %1254, %v567
        %v1256 = vpop.permute.xlu0 %1255
        %1258 = vset.pattern.permute.xlu0 1
        %1259 = vperm.xlu0 %1258, %v570
        %v1260 = vpop.permute.xlu0 %1259
        %v1262 = vmul.f32 %v389, %v1136
        %v1263 = vmul.f32 %v390, %v1140
        %v1264 = vmul.f32 %v391, %v1144
        %v1265 = vmul.f32 %v392, %v1148
        %v1266 = vmul.f32 %v393, %v1152
        %v1267 = vmul.f32 %v394, %v1156
        %v1268 = vmul.f32 %v395, %v1160
        %v1269 = vmul.f32 %v396, %v1164
        %v1270 = vmul.f32 %v397, %v1168
        %v1271 = vmul.f32 %v398, %v1172
        %v1272 = vmul.f32 %v399, %v1176
        %v1273 = vmul.f32 %v400, %v1180
        %v1274 = vmul.f32 %v401, %v1184
        %v1275 = vmul.f32 %v402, %v1188
        %v1276 = vmul.f32 %v403, %v1192
        %v1277 = vmul.f32 %v404, %v1196
        %v1278 = vmul.f32 %v405, %v1200
        %v1279 = vmul.f32 %v406, %v1204
        %v1280 = vmul.f32 %v407, %v1208
        %v1281 = vmul.f32 %v408, %v1212
        %v1282 = vmul.f32 %v409, %v1216
        %v1283 = vmul.f32 %v410, %v1220
        %v1284 = vmul.f32 %v411, %v1224
        %v1285 = vmul.f32 %v412, %v1228
        %v1286 = vmul.f32 %v413, %v1232
        %v1287 = vmul.f32 %v414, %v1236
        %v1288 = vmul.f32 %v415, %v1240
        %v1289 = vmul.f32 %v416, %v1244
        %v1290 = vmul.f32 %v417, %v1248
        %v1291 = vmul.f32 %v418, %v1252
        %v1292 = vmul.f32 %v419, %v1256
        %v1293 = vmul.f32 %v420, %v1260
        %1294 = vset.pattern.permute.xlu0 1
        %1295 = vperm.xlu0 %1294, %v590
        %v1296 = vpop.permute.xlu0 %1295
        %1298 = vset.pattern.permute.xlu0 1
        %1299 = vperm.xlu0 %1298, %v593
        %v1300 = vpop.permute.xlu0 %1299
        %1302 = vset.pattern.permute.xlu0 1
        %1303 = vperm.xlu0 %1302, %v596
        %v1304 = vpop.permute.xlu0 %1303
        %1306 = vset.pattern.permute.xlu0 1
        %1307 = vperm.xlu0 %1306, %v599
        %v1308 = vpop.permute.xlu0 %1307
        %1310 = vset.pattern.permute.xlu0 1
        %1311 = vperm.xlu0 %1310, %v602
        %v1312 = vpop.permute.xlu0 %1311
        %1314 = vset.pattern.permute.xlu0 1
        %1315 = vperm.xlu0 %1314, %v605
        %v1316 = vpop.permute.xlu0 %1315
        %1318 = vset.pattern.permute.xlu0 1
        %1319 = vperm.xlu0 %1318, %v608
        %v1320 = vpop.permute.xlu0 %1319
        %1322 = vset.pattern.permute.xlu0 1
        %1323 = vperm.xlu0 %1322, %v611
        %v1324 = vpop.permute.xlu0 %1323
        %1326 = vset.pattern.permute.xlu0 1
        %1327 = vperm.xlu0 %1326, %v614
        %v1328 = vpop.permute.xlu0 %1327
        %1330 = vset.pattern.permute.xlu0 1
        %1331 = vperm.xlu0 %1330, %v617
        %v1332 = vpop.permute.xlu0 %1331
        %1334 = vset.pattern.permute.xlu0 1
        %1335 = vperm.xlu0 %1334, %v620
        %v1336 = vpop.permute.xlu0 %1335
        %1338 = vset.pattern.permute.xlu0 1
        %1339 = vperm.xlu0 %1338, %v623
        %v1340 = vpop.permute.xlu0 %1339
        %1342 = vset.pattern.permute.xlu0 1
        %1343 = vperm.xlu0 %1342, %v626
        %v1344 = vpop.permute.xlu0 %1343
        %1346 = vset.pattern.permute.xlu0 1
        %1347 = vperm.xlu0 %1346, %v629
        %v1348 = vpop.permute.xlu0 %1347
        %1350 = vset.pattern.permute.xlu0 1
        %1351 = vperm.xlu0 %1350, %v632
        %v1352 = vpop.permute.xlu0 %1351
        %1354 = vset.pattern.permute.xlu0 1
        %1355 = vperm.xlu0 %1354, %v635
        %v1356 = vpop.permute.xlu0 %1355
        %1358 = vset.pattern.permute.xlu0 1
        %1359 = vperm.xlu0 %1358, %v638
        %v1360 = vpop.permute.xlu0 %1359
        %1362 = vset.pattern.permute.xlu0 1
        %1363 = vperm.xlu0 %1362, %v641
        %v1364 = vpop.permute.xlu0 %1363
        %1366 = vset.pattern.permute.xlu0 1
        %1367 = vperm.xlu0 %1366, %v644
        %v1368 = vpop.permute.xlu0 %1367
        %1370 = vset.pattern.permute.xlu0 1
        %1371 = vperm.xlu0 %1370, %v647
        %v1372 = vpop.permute.xlu0 %1371
        %1374 = vset.pattern.permute.xlu0 1
        %1375 = vperm.xlu0 %1374, %v650
        %v1376 = vpop.permute.xlu0 %1375
        %1378 = vset.pattern.permute.xlu0 1
        %1379 = vperm.xlu0 %1378, %v653
        %v1380 = vpop.permute.xlu0 %1379
        %1382 = vset.pattern.permute.xlu0 1
        %1383 = vperm.xlu0 %1382, %v656
        %v1384 = vpop.permute.xlu0 %1383
        %1386 = vset.pattern.permute.xlu0 1
        %1387 = vperm.xlu0 %1386, %v659
        %v1388 = vpop.permute.xlu0 %1387
        %1390 = vset.pattern.permute.xlu0 1
        %1391 = vperm.xlu0 %1390, %v662
        %v1392 = vpop.permute.xlu0 %1391
        %1394 = vset.pattern.permute.xlu0 1
        %1395 = vperm.xlu0 %1394, %v665
        %v1396 = vpop.permute.xlu0 %1395
        %1398 = vset.pattern.permute.xlu0 1
        %1399 = vperm.xlu0 %1398, %v668
        %v1400 = vpop.permute.xlu0 %1399
        %1402 = vset.pattern.permute.xlu0 1
        %1403 = vperm.xlu0 %1402, %v671
        %v1404 = vpop.permute.xlu0 %1403
        %1406 = vset.pattern.permute.xlu0 1
        %1407 = vperm.xlu0 %1406, %v674
        %v1408 = vpop.permute.xlu0 %1407
        %1410 = vset.pattern.permute.xlu0 1
        %1411 = vperm.xlu0 %1410, %v677
        %v1412 = vpop.permute.xlu0 %1411
        %1414 = vset.pattern.permute.xlu0 1
        %1415 = vperm.xlu0 %1414, %v680
        %v1416 = vpop.permute.xlu0 %1415
        %1418 = vset.pattern.permute.xlu0 1
        %1419 = vperm.xlu0 %1418, %v683
        %v1420 = vpop.permute.xlu0 %1419
        %v1422 = vmul.f32 %v421, %v1296
        %v1423 = vmul.f32 %v422, %v1300
        %v1424 = vmul.f32 %v423, %v1304
        %v1425 = vmul.f32 %v424, %v1308
        %v1426 = vmul.f32 %v425, %v1312
        %v1427 = vmul.f32 %v426, %v1316
        %v1428 = vmul.f32 %v427, %v1320
        %v1429 = vmul.f32 %v428, %v1324
        %v1430 = vmul.f32 %v429, %v1328
        %v1431 = vmul.f32 %v430, %v1332
        %v1432 = vmul.f32 %v431, %v1336
        %v1433 = vmul.f32 %v432, %v1340
        %v1434 = vmul.f32 %v433, %v1344
        %v1435 = vmul.f32 %v434, %v1348
        %v1436 = vmul.f32 %v435, %v1352
        %v1437 = vmul.f32 %v436, %v1356
        %v1438 = vmul.f32 %v437, %v1360
        %v1439 = vmul.f32 %v438, %v1364
        %v1440 = vmul.f32 %v439, %v1368
        %v1441 = vmul.f32 %v440, %v1372
        %v1442 = vmul.f32 %v441, %v1376
        %v1443 = vmul.f32 %v442, %v1380
        %v1444 = vmul.f32 %v443, %v1384
        %v1445 = vmul.f32 %v444, %v1388
        %v1446 = vmul.f32 %v445, %v1392
        %v1447 = vmul.f32 %v446, %v1396
        %v1448 = vmul.f32 %v447, %v1400
        %v1449 = vmul.f32 %v448, %v1404
        %v1450 = vmul.f32 %v449, %v1408
        %v1451 = vmul.f32 %v450, %v1412
        %v1452 = vmul.f32 %v451, %v1416
        %v1453 = vmul.f32 %v452, %v1420
        %v1454 = vadd.f32 %v1262, %v1422
        %v1455 = vadd.f32 %v1263, %v1423
        %v1456 = vadd.f32 %v1264, %v1424
        %v1457 = vadd.f32 %v1265, %v1425
        %v1458 = vadd.f32 %v1266, %v1426
        %v1459 = vadd.f32 %v1267, %v1427
        %v1460 = vadd.f32 %v1268, %v1428
        %v1461 = vadd.f32 %v1269, %v1429
        %v1462 = vadd.f32 %v1270, %v1430
        %v1463 = vadd.f32 %v1271, %v1431
        %v1464 = vadd.f32 %v1272, %v1432
        %v1465 = vadd.f32 %v1273, %v1433
        %v1466 = vadd.f32 %v1274, %v1434
        %v1467 = vadd.f32 %v1275, %v1435
        %v1468 = vadd.f32 %v1276, %v1436
        %v1469 = vadd.f32 %v1277, %v1437
        %v1470 = vadd.f32 %v1278, %v1438
        %v1471 = vadd.f32 %v1279, %v1439
        %v1472 = vadd.f32 %v1280, %v1440
        %v1473 = vadd.f32 %v1281, %v1441
        %v1474 = vadd.f32 %v1282, %v1442
        %v1475 = vadd.f32 %v1283, %v1443
        %v1476 = vadd.f32 %v1284, %v1444
        %v1477 = vadd.f32 %v1285, %v1445
        %v1478 = vadd.f32 %v1286, %v1446
        %v1479 = vadd.f32 %v1287, %v1447
        %v1480 = vadd.f32 %v1288, %v1448
        %v1481 = vadd.f32 %v1289, %v1449
        %v1482 = vadd.f32 %v1290, %v1450
        %v1483 = vadd.f32 %v1291, %v1451
        %v1484 = vadd.f32 %v1292, %v1452
        %v1485 = vadd.f32 %v1293, %v1453
        %v1486 = vperm.slane %v458, 0
        %v1487 = vadd.f32 %v1454, %v1486
        %v1488 = vadd.f32 %v1455, %v1486
        %v1489 = vadd.f32 %v1456, %v1486
        %v1490 = vadd.f32 %v1457, %v1486
        %v1491 = vadd.f32 %v1458, %v1486
        %v1492 = vadd.f32 %v1459, %v1486
        %v1493 = vadd.f32 %v1460, %v1486
        %v1494 = vadd.f32 %v1461, %v1486
        %v1495 = vadd.f32 %v1462, %v1486
        %v1496 = vadd.f32 %v1463, %v1486
        %v1497 = vadd.f32 %v1464, %v1486
        %v1498 = vadd.f32 %v1465, %v1486
        %v1499 = vadd.f32 %v1466, %v1486
        %v1500 = vadd.f32 %v1467, %v1486
        %v1501 = vadd.f32 %v1468, %v1486
        %v1502 = vadd.f32 %v1469, %v1486
        %v1503 = vadd.f32 %v1470, %v1486
        %v1504 = vadd.f32 %v1471, %v1486
        %v1505 = vadd.f32 %v1472, %v1486
        %v1506 = vadd.f32 %v1473, %v1486
        %v1507 = vadd.f32 %v1474, %v1486
        %v1508 = vadd.f32 %v1475, %v1486
        %v1509 = vadd.f32 %v1476, %v1486
        %v1510 = vadd.f32 %v1477, %v1486
        %v1511 = vadd.f32 %v1478, %v1486
        %v1512 = vadd.f32 %v1479, %v1486
        %v1513 = vadd.f32 %v1480, %v1486
        %v1514 = vadd.f32 %v1481, %v1486
        %v1515 = vadd.f32 %v1482, %v1486
        %v1516 = vadd.f32 %v1483, %v1486
        %v1517 = vadd.f32 %v1484, %v1486
        %v1518 = vadd.f32 %v1485, %v1486
        %1519 = vmatpush.xpose.msra.mxu0 0.0
        %1520 = vmatpush.xpose.msra.mxu0 0.0
        %1521 = vmatpush.xpose.msra.mxu0 0.0
        %1522 = vmatpush.xpose.msra.mxu0 0.0
        %1523 = vmatpush.xpose.msra.mxu0 0.0
        %1524 = vmatpush.xpose.msra.mxu0 0.0
        %1525 = vmatpush.xpose.msra.mxu0 0.0
        %1526 = vmatpush.xpose.msra.mxu0 0.0
        %1527 = vmatpush.xpose.msra.mxu0 0.0
        %1528 = vmatpush.xpose.msra.mxu0 0.0
        %1529 = vmatpush.xpose.msra.mxu0 0.0
        %1530 = vmatpush.xpose.msra.mxu0 0.0
        %1531 = vmatpush.xpose.msra.mxu0 0.0
        %1532 = vmatpush.xpose.msra.mxu0 0.0
        %1533 = vmatpush.xpose.msra.mxu0 0.0
        %1534 = vmatpush.xpose.msra.mxu0 %v454
        %1535 = vmatmul.f32.gmra.mxu0 %v1487
        %v1536 = vpop.f32.mrf.mxu0
        %v1537 = vadd.f32 0.0, %v1536
        %1538 = vmatmul.f32.gmra.mxu0 %v1488
        %v1539 = vpop.f32.mrf.mxu0
        %v1540 = vadd.f32 0.0, %v1539
        %1541 = vmatmul.f32.gmra.mxu0 %v1489
        %v1542 = vpop.f32.mrf.mxu0
        %v1543 = vadd.f32 0.0, %v1542
        %1544 = vmatmul.f32.gmra.mxu0 %v1490
        %v1545 = vpop.f32.mrf.mxu0
        %v1546 = vadd.f32 0.0, %v1545
        %1547 = vmatmul.f32.gmra.mxu0 %v1491
        %v1548 = vpop.f32.mrf.mxu0
        %v1549 = vadd.f32 0.0, %v1548
        %1550 = vmatmul.f32.gmra.mxu0 %v1492
        %v1551 = vpop.f32.mrf.mxu0
        %v1552 = vadd.f32 0.0, %v1551
        %1553 = vmatmul.f32.gmra.mxu0 %v1493
        %v1554 = vpop.f32.mrf.mxu0
        %v1555 = vadd.f32 0.0, %v1554
        %1556 = vmatmul.f32.gmra.mxu0 %v1494
        %v1557 = vpop.f32.mrf.mxu0
        %v1558 = vadd.f32 0.0, %v1557
        %1559 = vmatmul.f32.gmra.mxu0 %v1495
        %v1560 = vpop.f32.mrf.mxu0
        %v1561 = vadd.f32 0.0, %v1560
        %1562 = vmatmul.f32.gmra.mxu0 %v1496
        %v1563 = vpop.f32.mrf.mxu0
        %v1564 = vadd.f32 0.0, %v1563
        %1565 = vmatmul.f32.gmra.mxu0 %v1497
        %v1566 = vpop.f32.mrf.mxu0
        %v1567 = vadd.f32 0.0, %v1566
        %1568 = vmatmul.f32.gmra.mxu0 %v1498
        %v1569 = vpop.f32.mrf.mxu0
        %v1570 = vadd.f32 0.0, %v1569
        %1571 = vmatmul.f32.gmra.mxu0 %v1499
        %v1572 = vpop.f32.mrf.mxu0
        %v1573 = vadd.f32 0.0, %v1572
        %1574 = vmatmul.f32.gmra.mxu0 %v1500
        %v1575 = vpop.f32.mrf.mxu0
        %v1576 = vadd.f32 0.0, %v1575
        %1577 = vmatmul.f32.gmra.mxu0 %v1501
        %v1578 = vpop.f32.mrf.mxu0
        %v1579 = vadd.f32 0.0, %v1578
        %1580 = vmatmul.f32.gmra.mxu0 %v1502
        %v1581 = vpop.f32.mrf.mxu0
        %v1582 = vadd.f32 0.0, %v1581
        %1583 = vmatmul.f32.gmra.mxu0 %v1503
        %v1584 = vpop.f32.mrf.mxu0
        %v1585 = vadd.f32 0.0, %v1584
        %1586 = vmatmul.f32.gmra.mxu0 %v1504
        %v1587 = vpop.f32.mrf.mxu0
        %v1588 = vadd.f32 0.0, %v1587
        %1589 = vmatmul.f32.gmra.mxu0 %v1505
        %v1590 = vpop.f32.mrf.mxu0
        %v1591 = vadd.f32 0.0, %v1590
        %1592 = vmatmul.f32.gmra.mxu0 %v1506
        %v1593 = vpop.f32.mrf.mxu0
        %v1594 = vadd.f32 0.0, %v1593
        %1595 = vmatmul.f32.gmra.mxu0 %v1507
        %v1596 = vpop.f32.mrf.mxu0
        %v1597 = vadd.f32 0.0, %v1596
        %1598 = vmatmul.f32.gmra.mxu0 %v1508
        %v1599 = vpop.f32.mrf.mxu0
        %v1600 = vadd.f32 0.0, %v1599
        %1601 = vmatmul.f32.gmra.mxu0 %v1509
        %v1602 = vpop.f32.mrf.mxu0
        %v1603 = vadd.f32 0.0, %v1602
        %1604 = vmatmul.f32.gmra.mxu0 %v1510
        %v1605 = vpop.f32.mrf.mxu0
        %v1606 = vadd.f32 0.0, %v1605
        %1607 = vmatmul.f32.gmra.mxu0 %v1511
        %v1608 = vpop.f32.mrf.mxu0
        %v1609 = vadd.f32 0.0, %v1608
        %1610 = vmatmul.f32.gmra.mxu0 %v1512
        %v1611 = vpop.f32.mrf.mxu0
        %v1612 = vadd.f32 0.0, %v1611
        %1613 = vmatmul.f32.gmra.mxu0 %v1513
        %v1614 = vpop.f32.mrf.mxu0
        %v1615 = vadd.f32 0.0, %v1614
        %1616 = vmatmul.f32.gmra.mxu0 %v1514
        %v1617 = vpop.f32.mrf.mxu0
        %v1618 = vadd.f32 0.0, %v1617
        %1619 = vmatmul.f32.gmra.mxu0 %v1515
        %v1620 = vpop.f32.mrf.mxu0
        %v1621 = vadd.f32 0.0, %v1620
        %1622 = vmatmul.f32.gmra.mxu0 %v1516
        %v1623 = vpop.f32.mrf.mxu0
        %v1624 = vadd.f32 0.0, %v1623
        %1625 = vmatmul.f32.gmra.mxu0 %v1517
        %v1626 = vpop.f32.mrf.mxu0
        %v1627 = vadd.f32 0.0, %v1626
        %1628 = vmatmul.f32.gmra.mxu0 %v1518
        %v1629 = vpop.f32.mrf.mxu0
        %v1630 = vadd.f32 0.0, %v1629
        %1631 = vdwg.mxu0
        %1632 = vmatpush.xpose.msra.mxu0 0.0
        %1633 = vmatpush.xpose.msra.mxu0 0.0
        %1634 = vmatpush.xpose.msra.mxu0 0.0
        %1635 = vmatpush.xpose.msra.mxu0 0.0
        %1636 = vmatpush.xpose.msra.mxu0 0.0
        %1637 = vmatpush.xpose.msra.mxu0 0.0
        %1638 = vmatpush.xpose.msra.mxu0 0.0
        %1639 = vmatpush.xpose.msra.mxu0 0.0
        %1640 = vmatpush.xpose.msra.mxu0 0.0
        %1641 = vmatpush.xpose.msra.mxu0 0.0
        %1642 = vmatpush.xpose.msra.mxu0 0.0
        %1643 = vmatpush.xpose.msra.mxu0 0.0
        %1644 = vmatpush.xpose.msra.mxu0 0.0
        %1645 = vmatpush.xpose.msra.mxu0 0.0
        %1646 = vmatpush.xpose.msra.mxu0 0.0
        %1647 = vmatpush.xpose.msra.mxu0 %v456
        %1648 = vmatmul.f32.gmra.mxu0 %v1102
        %v1649 = vpop.f32.mrf.mxu0
        %v1650 = vadd.f32 0.0, %v1649
        %1651 = vmatmul.f32.gmra.mxu0 %v1103
        %v1652 = vpop.f32.mrf.mxu0
        %v1653 = vadd.f32 0.0, %v1652
        %1654 = vmatmul.f32.gmra.mxu0 %v1104
        %v1655 = vpop.f32.mrf.mxu0
        %v1656 = vadd.f32 0.0, %v1655
        %1657 = vmatmul.f32.gmra.mxu0 %v1105
        %v1658 = vpop.f32.mrf.mxu0
        %v1659 = vadd.f32 0.0, %v1658
        %1660 = vmatmul.f32.gmra.mxu0 %v1106
        %v1661 = vpop.f32.mrf.mxu0
        %v1662 = vadd.f32 0.0, %v1661
        %1663 = vmatmul.f32.gmra.mxu0 %v1107
        %v1664 = vpop.f32.mrf.mxu0
        %v1665 = vadd.f32 0.0, %v1664
        %1666 = vmatmul.f32.gmra.mxu0 %v1108
        %v1667 = vpop.f32.mrf.mxu0
        %v1668 = vadd.f32 0.0, %v1667
        %1669 = vmatmul.f32.gmra.mxu0 %v1109
        %v1670 = vpop.f32.mrf.mxu0
        %v1671 = vadd.f32 0.0, %v1670
        %1672 = vmatmul.f32.gmra.mxu0 %v1110
        %v1673 = vpop.f32.mrf.mxu0
        %v1674 = vadd.f32 0.0, %v1673
        %1675 = vmatmul.f32.gmra.mxu0 %v1111
        %v1676 = vpop.f32.mrf.mxu0
        %v1677 = vadd.f32 0.0, %v1676
        %1678 = vmatmul.f32.gmra.mxu0 %v1112
        %v1679 = vpop.f32.mrf.mxu0
        %v1680 = vadd.f32 0.0, %v1679
        %1681 = vmatmul.f32.gmra.mxu0 %v1113
        %v1682 = vpop.f32.mrf.mxu0
        %v1683 = vadd.f32 0.0, %v1682
        %1684 = vmatmul.f32.gmra.mxu0 %v1114
        %v1685 = vpop.f32.mrf.mxu0
        %v1686 = vadd.f32 0.0, %v1685
        %1687 = vmatmul.f32.gmra.mxu0 %v1115
        %v1688 = vpop.f32.mrf.mxu0
        %v1689 = vadd.f32 0.0, %v1688
        %1690 = vmatmul.f32.gmra.mxu0 %v1116
        %v1691 = vpop.f32.mrf.mxu0
        %v1692 = vadd.f32 0.0, %v1691
        %1693 = vmatmul.f32.gmra.mxu0 %v1117
        %v1694 = vpop.f32.mrf.mxu0
        %v1695 = vadd.f32 0.0, %v1694
        %1696 = vmatmul.f32.gmra.mxu0 %v1118
        %v1697 = vpop.f32.mrf.mxu0
        %v1698 = vadd.f32 0.0, %v1697
        %1699 = vmatmul.f32.gmra.mxu0 %v1119
        %v1700 = vpop.f32.mrf.mxu0
        %v1701 = vadd.f32 0.0, %v1700
        %1702 = vmatmul.f32.gmra.mxu0 %v1120
        %v1703 = vpop.f32.mrf.mxu0
        %v1704 = vadd.f32 0.0, %v1703
        %1705 = vmatmul.f32.gmra.mxu0 %v1121
        %v1706 = vpop.f32.mrf.mxu0
        %v1707 = vadd.f32 0.0, %v1706
        %1708 = vmatmul.f32.gmra.mxu0 %v1122
        %v1709 = vpop.f32.mrf.mxu0
        %v1710 = vadd.f32 0.0, %v1709
        %1711 = vmatmul.f32.gmra.mxu0 %v1123
        %v1712 = vpop.f32.mrf.mxu0
        %v1713 = vadd.f32 0.0, %v1712
        %1714 = vmatmul.f32.gmra.mxu0 %v1124
        %v1715 = vpop.f32.mrf.mxu0
        %v1716 = vadd.f32 0.0, %v1715
        %1717 = vmatmul.f32.gmra.mxu0 %v1125
        %v1718 = vpop.f32.mrf.mxu0
        %v1719 = vadd.f32 0.0, %v1718
        %1720 = vmatmul.f32.gmra.mxu0 %v1126
        %v1721 = vpop.f32.mrf.mxu0
        %v1722 = vadd.f32 0.0, %v1721
        %1723 = vmatmul.f32.gmra.mxu0 %v1127
        %v1724 = vpop.f32.mrf.mxu0
        %v1725 = vadd.f32 0.0, %v1724
        %1726 = vmatmul.f32.gmra.mxu0 %v1128
        %v1727 = vpop.f32.mrf.mxu0
        %v1728 = vadd.f32 0.0, %v1727
        %1729 = vmatmul.f32.gmra.mxu0 %v1129
        %v1730 = vpop.f32.mrf.mxu0
        %v1731 = vadd.f32 0.0, %v1730
        %1732 = vmatmul.f32.gmra.mxu0 %v1130
        %v1733 = vpop.f32.mrf.mxu0
        %v1734 = vadd.f32 0.0, %v1733
        %1735 = vmatmul.f32.gmra.mxu0 %v1131
        %v1736 = vpop.f32.mrf.mxu0
        %v1737 = vadd.f32 0.0, %v1736
        %1738 = vmatmul.f32.gmra.mxu0 %v1132
        %v1739 = vpop.f32.mrf.mxu0
        %v1740 = vadd.f32 0.0, %v1739
        %1741 = vmatmul.f32.gmra.mxu0 %v1133
        %v1742 = vpop.f32.mrf.mxu0
        %v1743 = vadd.f32 0.0, %v1742
        %1744 = vdwg.mxu0
        %1746 = vset.pattern.permute.xlu0 0
        %1747 = vperm.xlu0 %1746, %v1537
        %v1748 = vpop.permute.xlu0 %1747
        %1751 = vset.pattern.permute.xlu0 0
        %1752 = vperm.xlu0 %1751, %v1540
        %v1753 = vpop.permute.xlu0 %1752
        %1756 = vset.pattern.permute.xlu0 0
        %1757 = vperm.xlu0 %1756, %v1543
        %v1758 = vpop.permute.xlu0 %1757
        %1761 = vset.pattern.permute.xlu0 0
        %1762 = vperm.xlu0 %1761, %v1546
        %v1763 = vpop.permute.xlu0 %1762
        %1766 = vset.pattern.permute.xlu0 0
        %1767 = vperm.xlu0 %1766, %v1549
        %v1768 = vpop.permute.xlu0 %1767
        %1771 = vset.pattern.permute.xlu0 0
        %1772 = vperm.xlu0 %1771, %v1552
        %v1773 = vpop.permute.xlu0 %1772
        %1776 = vset.pattern.permute.xlu0 0
        %1777 = vperm.xlu0 %1776, %v1555
        %v1778 = vpop.permute.xlu0 %1777
        %1781 = vset.pattern.permute.xlu0 0
        %1782 = vperm.xlu0 %1781, %v1558
        %v1783 = vpop.permute.xlu0 %1782
        %1786 = vset.pattern.permute.xlu0 0
        %1787 = vperm.xlu0 %1786, %v1561
        %v1788 = vpop.permute.xlu0 %1787
        %1791 = vset.pattern.permute.xlu0 0
        %1792 = vperm.xlu0 %1791, %v1564
        %v1793 = vpop.permute.xlu0 %1792
        %1796 = vset.pattern.permute.xlu0 0
        %1797 = vperm.xlu0 %1796, %v1567
        %v1798 = vpop.permute.xlu0 %1797
        %1801 = vset.pattern.permute.xlu0 0
        %1802 = vperm.xlu0 %1801, %v1570
        %v1803 = vpop.permute.xlu0 %1802
        %1806 = vset.pattern.permute.xlu0 0
        %1807 = vperm.xlu0 %1806, %v1573
        %v1808 = vpop.permute.xlu0 %1807
        %1811 = vset.pattern.permute.xlu0 0
        %1812 = vperm.xlu0 %1811, %v1576
        %v1813 = vpop.permute.xlu0 %1812
        %1816 = vset.pattern.permute.xlu0 0
        %1817 = vperm.xlu0 %1816, %v1579
        %v1818 = vpop.permute.xlu0 %1817
        %1821 = vset.pattern.permute.xlu0 0
        %1822 = vperm.xlu0 %1821, %v1582
        %v1823 = vpop.permute.xlu0 %1822
        %1826 = vset.pattern.permute.xlu0 0
        %1827 = vperm.xlu0 %1826, %v1585
        %v1828 = vpop.permute.xlu0 %1827
        %1831 = vset.pattern.permute.xlu0 0
        %1832 = vperm.xlu0 %1831, %v1588
        %v1833 = vpop.permute.xlu0 %1832
        %1836 = vset.pattern.permute.xlu0 0
        %1837 = vperm.xlu0 %1836, %v1591
        %v1838 = vpop.permute.xlu0 %1837
        %1841 = vset.pattern.permute.xlu0 0
        %1842 = vperm.xlu0 %1841, %v1594
        %v1843 = vpop.permute.xlu0 %1842
        %1846 = vset.pattern.permute.xlu0 0
        %1847 = vperm.xlu0 %1846, %v1597
        %v1848 = vpop.permute.xlu0 %1847
        %1851 = vset.pattern.permute.xlu0 0
        %1852 = vperm.xlu0 %1851, %v1600
        %v1853 = vpop.permute.xlu0 %1852
        %1856 = vset.pattern.permute.xlu0 0
        %1857 = vperm.xlu0 %1856, %v1603
        %v1858 = vpop.permute.xlu0 %1857
        %1861 = vset.pattern.permute.xlu0 0
        %1862 = vperm.xlu0 %1861, %v1606
        %v1863 = vpop.permute.xlu0 %1862
        %1866 = vset.pattern.permute.xlu0 0
        %1867 = vperm.xlu0 %1866, %v1609
        %v1868 = vpop.permute.xlu0 %1867
        %1871 = vset.pattern.permute.xlu0 0
        %1872 = vperm.xlu0 %1871, %v1612
        %v1873 = vpop.permute.xlu0 %1872
        %1876 = vset.pattern.permute.xlu0 0
        %1877 = vperm.xlu0 %1876, %v1615
        %v1878 = vpop.permute.xlu0 %1877
        %1881 = vset.pattern.permute.xlu0 0
        %1882 = vperm.xlu0 %1881, %v1618
        %v1883 = vpop.permute.xlu0 %1882
        %1886 = vset.pattern.permute.xlu0 0
        %1887 = vperm.xlu0 %1886, %v1621
        %v1888 = vpop.permute.xlu0 %1887
        %1891 = vset.pattern.permute.xlu0 0
        %1892 = vperm.xlu0 %1891, %v1624
        %v1893 = vpop.permute.xlu0 %1892
        %1896 = vset.pattern.permute.xlu0 0
        %1897 = vperm.xlu0 %1896, %v1627
        %v1898 = vpop.permute.xlu0 %1897
        %1901 = vset.pattern.permute.xlu0 0
        %1902 = vperm.xlu0 %1901, %v1630
        %v1903 = vpop.permute.xlu0 %1902
        %v1905 = vmul.f32 %v1102, %v1748
        %v1906 = vmul.f32 %v1103, %v1753
        %v1907 = vmul.f32 %v1104, %v1758
        %v1908 = vmul.f32 %v1105, %v1763
        %v1909 = vmul.f32 %v1106, %v1768
        %v1910 = vmul.f32 %v1107, %v1773
        %v1911 = vmul.f32 %v1108, %v1778
        %v1912 = vmul.f32 %v1109, %v1783
        %v1913 = vmul.f32 %v1110, %v1788
        %v1914 = vmul.f32 %v1111, %v1793
        %v1915 = vmul.f32 %v1112, %v1798
        %v1916 = vmul.f32 %v1113, %v1803
        %v1917 = vmul.f32 %v1114, %v1808
        %v1918 = vmul.f32 %v1115, %v1813
        %v1919 = vmul.f32 %v1116, %v1818
        %v1920 = vmul.f32 %v1117, %v1823
        %v1921 = vmul.f32 %v1118, %v1828
        %v1922 = vmul.f32 %v1119, %v1833
        %v1923 = vmul.f32 %v1120, %v1838
        %v1924 = vmul.f32 %v1121, %v1843
        %v1925 = vmul.f32 %v1122, %v1848
        %v1926 = vmul.f32 %v1123, %v1853
        %v1927 = vmul.f32 %v1124, %v1858
        %v1928 = vmul.f32 %v1125, %v1863
        %v1929 = vmul.f32 %v1126, %v1868
        %v1930 = vmul.f32 %v1127, %v1873
        %v1931 = vmul.f32 %v1128, %v1878
        %v1932 = vmul.f32 %v1129, %v1883
        %v1933 = vmul.f32 %v1130, %v1888
        %v1934 = vmul.f32 %v1131, %v1893
        %v1935 = vmul.f32 %v1132, %v1898
        %v1936 = vmul.f32 %v1133, %v1903
        %1938 = vset.pattern.permute.xlu0 0
        %1939 = vperm.xlu0 %1938, %v1650
        %v1940 = vpop.permute.xlu0 %1939
        %1943 = vset.pattern.permute.xlu0 0
        %1944 = vperm.xlu0 %1943, %v1653
        %v1945 = vpop.permute.xlu0 %1944
        %1948 = vset.pattern.permute.xlu0 0
        %1949 = vperm.xlu0 %1948, %v1656
        %v1950 = vpop.permute.xlu0 %1949
        %1953 = vset.pattern.permute.xlu0 0
        %1954 = vperm.xlu0 %1953, %v1659
        %v1955 = vpop.permute.xlu0 %1954
        %1958 = vset.pattern.permute.xlu0 0
        %1959 = vperm.xlu0 %1958, %v1662
        %v1960 = vpop.permute.xlu0 %1959
        %1963 = vset.pattern.permute.xlu0 0
        %1964 = vperm.xlu0 %1963, %v1665
        %v1965 = vpop.permute.xlu0 %1964
        %1968 = vset.pattern.permute.xlu0 0
        %1969 = vperm.xlu0 %1968, %v1668
        %v1970 = vpop.permute.xlu0 %1969
        %1973 = vset.pattern.permute.xlu0 0
        %1974 = vperm.xlu0 %1973, %v1671
        %v1975 = vpop.permute.xlu0 %1974
        %1978 = vset.pattern.permute.xlu0 0
        %1979 = vperm.xlu0 %1978, %v1674
        %v1980 = vpop.permute.xlu0 %1979
        %1983 = vset.pattern.permute.xlu0 0
        %1984 = vperm.xlu0 %1983, %v1677
        %v1985 = vpop.permute.xlu0 %1984
        %1988 = vset.pattern.permute.xlu0 0
        %1989 = vperm.xlu0 %1988, %v1680
        %v1990 = vpop.permute.xlu0 %1989
        %1993 = vset.pattern.permute.xlu0 0
        %1994 = vperm.xlu0 %1993, %v1683
        %v1995 = vpop.permute.xlu0 %1994
        %1998 = vset.pattern.permute.xlu0 0
        %1999 = vperm.xlu0 %1998, %v1686
        %v2000 = vpop.permute.xlu0 %1999
        %2003 = vset.pattern.permute.xlu0 0
        %2004 = vperm.xlu0 %2003, %v1689
        %v2005 = vpop.permute.xlu0 %2004
        %2008 = vset.pattern.permute.xlu0 0
        %2009 = vperm.xlu0 %2008, %v1692
        %v2010 = vpop.permute.xlu0 %2009
        %2013 = vset.pattern.permute.xlu0 0
        %2014 = vperm.xlu0 %2013, %v1695
        %v2015 = vpop.permute.xlu0 %2014
        %2018 = vset.pattern.permute.xlu0 0
        %2019 = vperm.xlu0 %2018, %v1698
        %v2020 = vpop.permute.xlu0 %2019
        %2023 = vset.pattern.permute.xlu0 0
        %2024 = vperm.xlu0 %2023, %v1701
        %v2025 = vpop.permute.xlu0 %2024
        %2028 = vset.pattern.permute.xlu0 0
        %2029 = vperm.xlu0 %2028, %v1704
        %v2030 = vpop.permute.xlu0 %2029
        %2033 = vset.pattern.permute.xlu0 0
        %2034 = vperm.xlu0 %2033, %v1707
        %v2035 = vpop.permute.xlu0 %2034
        %2038 = vset.pattern.permute.xlu0 0
        %2039 = vperm.xlu0 %2038, %v1710
        %v2040 = vpop.permute.xlu0 %2039
        %2043 = vset.pattern.permute.xlu0 0
        %2044 = vperm.xlu0 %2043, %v1713
        %v2045 = vpop.permute.xlu0 %2044
        %2048 = vset.pattern.permute.xlu0 0
        %2049 = vperm.xlu0 %2048, %v1716
        %v2050 = vpop.permute.xlu0 %2049
        %2053 = vset.pattern.permute.xlu0 0
        %2054 = vperm.xlu0 %2053, %v1719
        %v2055 = vpop.permute.xlu0 %2054
        %2058 = vset.pattern.permute.xlu0 0
        %2059 = vperm.xlu0 %2058, %v1722
        %v2060 = vpop.permute.xlu0 %2059
        %2063 = vset.pattern.permute.xlu0 0
        %2064 = vperm.xlu0 %2063, %v1725
        %v2065 = vpop.permute.xlu0 %2064
        %2068 = vset.pattern.permute.xlu0 0
        %2069 = vperm.xlu0 %2068, %v1728
        %v2070 = vpop.permute.xlu0 %2069
        %2073 = vset.pattern.permute.xlu0 0
        %2074 = vperm.xlu0 %2073, %v1731
        %v2075 = vpop.permute.xlu0 %2074
        %2078 = vset.pattern.permute.xlu0 0
        %2079 = vperm.xlu0 %2078, %v1734
        %v2080 = vpop.permute.xlu0 %2079
        %2083 = vset.pattern.permute.xlu0 0
        %2084 = vperm.xlu0 %2083, %v1737
        %v2085 = vpop.permute.xlu0 %2084
        %2088 = vset.pattern.permute.xlu0 0
        %2089 = vperm.xlu0 %2088, %v1740
        %v2090 = vpop.permute.xlu0 %2089
        %2093 = vset.pattern.permute.xlu0 0
        %2094 = vperm.xlu0 %2093, %v1743
        %v2095 = vpop.permute.xlu0 %2094
        %v2097 = vmul.f32 %v1487, %v1940
        %v2098 = vmul.f32 %v1488, %v1945
        %v2099 = vmul.f32 %v1489, %v1950
        %v2100 = vmul.f32 %v1490, %v1955
        %v2101 = vmul.f32 %v1491, %v1960
        %v2102 = vmul.f32 %v1492, %v1965
        %v2103 = vmul.f32 %v1493, %v1970
        %v2104 = vmul.f32 %v1494, %v1975
        %v2105 = vmul.f32 %v1495, %v1980
        %v2106 = vmul.f32 %v1496, %v1985
        %v2107 = vmul.f32 %v1497, %v1990
        %v2108 = vmul.f32 %v1498, %v1995
        %v2109 = vmul.f32 %v1499, %v2000
        %v2110 = vmul.f32 %v1500, %v2005
        %v2111 = vmul.f32 %v1501, %v2010
        %v2112 = vmul.f32 %v1502, %v2015
        %v2113 = vmul.f32 %v1503, %v2020
        %v2114 = vmul.f32 %v1504, %v2025
        %v2115 = vmul.f32 %v1505, %v2030
        %v2116 = vmul.f32 %v1506, %v2035
        %v2117 = vmul.f32 %v1507, %v2040
        %v2118 = vmul.f32 %v1508, %v2045
        %v2119 = vmul.f32 %v1509, %v2050
        %v2120 = vmul.f32 %v1510, %v2055
        %v2121 = vmul.f32 %v1511, %v2060
        %v2122 = vmul.f32 %v1512, %v2065
        %v2123 = vmul.f32 %v1513, %v2070
        %v2124 = vmul.f32 %v1514, %v2075
        %v2125 = vmul.f32 %v1515, %v2080
        %v2126 = vmul.f32 %v1516, %v2085
        %v2127 = vmul.f32 %v1517, %v2090
        %v2128 = vmul.f32 %v1518, %v2095
        %v2129 = vadd.f32 %v1905, %v2097
        %v2130 = vadd.f32 %v1906, %v2098
        %v2131 = vadd.f32 %v1907, %v2099
        %v2132 = vadd.f32 %v1908, %v2100
        %v2133 = vadd.f32 %v1909, %v2101
        %v2134 = vadd.f32 %v1910, %v2102
        %v2135 = vadd.f32 %v1911, %v2103
        %v2136 = vadd.f32 %v1912, %v2104
        %v2137 = vadd.f32 %v1913, %v2105
        %v2138 = vadd.f32 %v1914, %v2106
        %v2139 = vadd.f32 %v1915, %v2107
        %v2140 = vadd.f32 %v1916, %v2108
        %v2141 = vadd.f32 %v1917, %v2109
        %v2142 = vadd.f32 %v1918, %v2110
        %v2143 = vadd.f32 %v1919, %v2111
        %v2144 = vadd.f32 %v1920, %v2112
        %v2145 = vadd.f32 %v1921, %v2113
        %v2146 = vadd.f32 %v1922, %v2114
        %v2147 = vadd.f32 %v1923, %v2115
        %v2148 = vadd.f32 %v1924, %v2116
        %v2149 = vadd.f32 %v1925, %v2117
        %v2150 = vadd.f32 %v1926, %v2118
        %v2151 = vadd.f32 %v1927, %v2119
        %v2152 = vadd.f32 %v1928, %v2120
        %v2153 = vadd.f32 %v1929, %v2121
        %v2154 = vadd.f32 %v1930, %v2122
        %v2155 = vadd.f32 %v1931, %v2123
        %v2156 = vadd.f32 %v1932, %v2124
        %v2157 = vadd.f32 %v1933, %v2125
        %v2158 = vadd.f32 %v1934, %v2126
        %v2159 = vadd.f32 %v1935, %v2127
        %v2160 = vadd.f32 %v1936, %v2128
        %v2161 = vperm.slane %v457, 1
        %v2162 = vadd.f32 %v2129, %v2161
        %v2163 = vadd.f32 %v2130, %v2161
        %v2164 = vadd.f32 %v2131, %v2161
        %v2165 = vadd.f32 %v2132, %v2161
        %v2166 = vadd.f32 %v2133, %v2161
        %v2167 = vadd.f32 %v2134, %v2161
        %v2168 = vadd.f32 %v2135, %v2161
        %v2169 = vadd.f32 %v2136, %v2161
        %v2170 = vadd.f32 %v2137, %v2161
        %v2171 = vadd.f32 %v2138, %v2161
        %v2172 = vadd.f32 %v2139, %v2161
        %v2173 = vadd.f32 %v2140, %v2161
        %v2174 = vadd.f32 %v2141, %v2161
        %v2175 = vadd.f32 %v2142, %v2161
        %v2176 = vadd.f32 %v2143, %v2161
        %v2177 = vadd.f32 %v2144, %v2161
        %v2178 = vadd.f32 %v2145, %v2161
        %v2179 = vadd.f32 %v2146, %v2161
        %v2180 = vadd.f32 %v2147, %v2161
        %v2181 = vadd.f32 %v2148, %v2161
        %v2182 = vadd.f32 %v2149, %v2161
        %v2183 = vadd.f32 %v2150, %v2161
        %v2184 = vadd.f32 %v2151, %v2161
        %v2185 = vadd.f32 %v2152, %v2161
        %v2186 = vadd.f32 %v2153, %v2161
        %v2187 = vadd.f32 %v2154, %v2161
        %v2188 = vadd.f32 %v2155, %v2161
        %v2189 = vadd.f32 %v2156, %v2161
        %v2190 = vadd.f32 %v2157, %v2161
        %v2191 = vadd.f32 %v2158, %v2161
        %v2192 = vadd.f32 %v2159, %v2161
        %v2193 = vadd.f32 %v2160, %v2161
        %2194 = vset.pattern.permute.xlu0 1
        %2195 = vperm.xlu0 %2194, %v1537
        %v2196 = vpop.permute.xlu0 %2195
        %2198 = vset.pattern.permute.xlu0 1
        %2199 = vperm.xlu0 %2198, %v1540
        %v2200 = vpop.permute.xlu0 %2199
        %2202 = vset.pattern.permute.xlu0 1
        %2203 = vperm.xlu0 %2202, %v1543
        %v2204 = vpop.permute.xlu0 %2203
        %2206 = vset.pattern.permute.xlu0 1
        %2207 = vperm.xlu0 %2206, %v1546
        %v2208 = vpop.permute.xlu0 %2207
        %2210 = vset.pattern.permute.xlu0 1
        %2211 = vperm.xlu0 %2210, %v1549
        %v2212 = vpop.permute.xlu0 %2211
        %2214 = vset.pattern.permute.xlu0 1
        %2215 = vperm.xlu0 %2214, %v1552
        %v2216 = vpop.permute.xlu0 %2215
        %2218 = vset.pattern.permute.xlu0 1
        %2219 = vperm.xlu0 %2218, %v1555
        %v2220 = vpop.permute.xlu0 %2219
        %2222 = vset.pattern.permute.xlu0 1
        %2223 = vperm.xlu0 %2222, %v1558
        %v2224 = vpop.permute.xlu0 %2223
        %2226 = vset.pattern.permute.xlu0 1
        %2227 = vperm.xlu0 %2226, %v1561
        %v2228 = vpop.permute.xlu0 %2227
        %2230 = vset.pattern.permute.xlu0 1
        %2231 = vperm.xlu0 %2230, %v1564
        %v2232 = vpop.permute.xlu0 %2231
        %2234 = vset.pattern.permute.xlu0 1
        %2235 = vperm.xlu0 %2234, %v1567
        %v2236 = vpop.permute.xlu0 %2235
        %2238 = vset.pattern.permute.xlu0 1
        %2239 = vperm.xlu0 %2238, %v1570
        %v2240 = vpop.permute.xlu0 %2239
        %2242 = vset.pattern.permute.xlu0 1
        %2243 = vperm.xlu0 %2242, %v1573
        %v2244 = vpop.permute.xlu0 %2243
        %2246 = vset.pattern.permute.xlu0 1
        %2247 = vperm.xlu0 %2246, %v1576
        %v2248 = vpop.permute.xlu0 %2247
        %2250 = vset.pattern.permute.xlu0 1
        %2251 = vperm.xlu0 %2250, %v1579
        %v2252 = vpop.permute.xlu0 %2251
        %2254 = vset.pattern.permute.xlu0 1
        %2255 = vperm.xlu0 %2254, %v1582
        %v2256 = vpop.permute.xlu0 %2255
        %2258 = vset.pattern.permute.xlu0 1
        %2259 = vperm.xlu0 %2258, %v1585
        %v2260 = vpop.permute.xlu0 %2259
        %2262 = vset.pattern.permute.xlu0 1
        %2263 = vperm.xlu0 %2262, %v1588
        %v2264 = vpop.permute.xlu0 %2263
        %2266 = vset.pattern.permute.xlu0 1
        %2267 = vperm.xlu0 %2266, %v1591
        %v2268 = vpop.permute.xlu0 %2267
        %2270 = vset.pattern.permute.xlu0 1
        %2271 = vperm.xlu0 %2270, %v1594
        %v2272 = vpop.permute.xlu0 %2271
        %2274 = vset.pattern.permute.xlu0 1
        %2275 = vperm.xlu0 %2274, %v1597
        %v2276 = vpop.permute.xlu0 %2275
        %2278 = vset.pattern.permute.xlu0 1
        %2279 = vperm.xlu0 %2278, %v1600
        %v2280 = vpop.permute.xlu0 %2279
        %2282 = vset.pattern.permute.xlu0 1
        %2283 = vperm.xlu0 %2282, %v1603
        %v2284 = vpop.permute.xlu0 %2283
        %2286 = vset.pattern.permute.xlu0 1
        %2287 = vperm.xlu0 %2286, %v1606
        %v2288 = vpop.permute.xlu0 %2287
        %2290 = vset.pattern.permute.xlu0 1
        %2291 = vperm.xlu0 %2290, %v1609
        %v2292 = vpop.permute.xlu0 %2291
        %2294 = vset.pattern.permute.xlu0 1
        %2295 = vperm.xlu0 %2294, %v1612
        %v2296 = vpop.permute.xlu0 %2295
        %2298 = vset.pattern.permute.xlu0 1
        %2299 = vperm.xlu0 %2298, %v1615
        %v2300 = vpop.permute.xlu0 %2299
        %2302 = vset.pattern.permute.xlu0 1
        %2303 = vperm.xlu0 %2302, %v1618
        %v2304 = vpop.permute.xlu0 %2303
        %2306 = vset.pattern.permute.xlu0 1
        %2307 = vperm.xlu0 %2306, %v1621
        %v2308 = vpop.permute.xlu0 %2307
        %2310 = vset.pattern.permute.xlu0 1
        %2311 = vperm.xlu0 %2310, %v1624
        %v2312 = vpop.permute.xlu0 %2311
        %2314 = vset.pattern.permute.xlu0 1
        %2315 = vperm.xlu0 %2314, %v1627
        %v2316 = vpop.permute.xlu0 %2315
        %2318 = vset.pattern.permute.xlu0 1
        %2319 = vperm.xlu0 %2318, %v1630
        %v2320 = vpop.permute.xlu0 %2319
        %v2322 = vmul.f32 %v1102, %v2196
        %v2323 = vmul.f32 %v1103, %v2200
        %v2324 = vmul.f32 %v1104, %v2204
        %v2325 = vmul.f32 %v1105, %v2208
        %v2326 = vmul.f32 %v1106, %v2212
        %v2327 = vmul.f32 %v1107, %v2216
        %v2328 = vmul.f32 %v1108, %v2220
        %v2329 = vmul.f32 %v1109, %v2224
        %v2330 = vmul.f32 %v1110, %v2228
        %v2331 = vmul.f32 %v1111, %v2232
        %v2332 = vmul.f32 %v1112, %v2236
        %v2333 = vmul.f32 %v1113, %v2240
        %v2334 = vmul.f32 %v1114, %v2244
        %v2335 = vmul.f32 %v1115, %v2248
        %v2336 = vmul.f32 %v1116, %v2252
        %v2337 = vmul.f32 %v1117, %v2256
        %v2338 = vmul.f32 %v1118, %v2260
        %v2339 = vmul.f32 %v1119, %v2264
        %v2340 = vmul.f32 %v1120, %v2268
        %v2341 = vmul.f32 %v1121, %v2272
        %v2342 = vmul.f32 %v1122, %v2276
        %v2343 = vmul.f32 %v1123, %v2280
        %v2344 = vmul.f32 %v1124, %v2284
        %v2345 = vmul.f32 %v1125, %v2288
        %v2346 = vmul.f32 %v1126, %v2292
        %v2347 = vmul.f32 %v1127, %v2296
        %v2348 = vmul.f32 %v1128, %v2300
        %v2349 = vmul.f32 %v1129, %v2304
        %v2350 = vmul.f32 %v1130, %v2308
        %v2351 = vmul.f32 %v1131, %v2312
        %v2352 = vmul.f32 %v1132, %v2316
        %v2353 = vmul.f32 %v1133, %v2320
        %2354 = vset.pattern.permute.xlu0 1
        %2355 = vperm.xlu0 %2354, %v1650
        %v2356 = vpop.permute.xlu0 %2355
        %2358 = vset.pattern.permute.xlu0 1
        %2359 = vperm.xlu0 %2358, %v1653
        %v2360 = vpop.permute.xlu0 %2359
        %2362 = vset.pattern.permute.xlu0 1
        %2363 = vperm.xlu0 %2362, %v1656
        %v2364 = vpop.permute.xlu0 %2363
        %2366 = vset.pattern.permute.xlu0 1
        %2367 = vperm.xlu0 %2366, %v1659
        %v2368 = vpop.permute.xlu0 %2367
        %2370 = vset.pattern.permute.xlu0 1
        %2371 = vperm.xlu0 %2370, %v1662
        %v2372 = vpop.permute.xlu0 %2371
        %2374 = vset.pattern.permute.xlu0 1
        %2375 = vperm.xlu0 %2374, %v1665
        %v2376 = vpop.permute.xlu0 %2375
        %2378 = vset.pattern.permute.xlu0 1
        %2379 = vperm.xlu0 %2378, %v1668
        %v2380 = vpop.permute.xlu0 %2379
        %2382 = vset.pattern.permute.xlu0 1
        %2383 = vperm.xlu0 %2382, %v1671
        %v2384 = vpop.permute.xlu0 %2383
        %2386 = vset.pattern.permute.xlu0 1
        %2387 = vperm.xlu0 %2386, %v1674
        %v2388 = vpop.permute.xlu0 %2387
        %2390 = vset.pattern.permute.xlu0 1
        %2391 = vperm.xlu0 %2390, %v1677
        %v2392 = vpop.permute.xlu0 %2391
        %2394 = vset.pattern.permute.xlu0 1
        %2395 = vperm.xlu0 %2394, %v1680
        %v2396 = vpop.permute.xlu0 %2395
        %2398 = vset.pattern.permute.xlu0 1
        %2399 = vperm.xlu0 %2398, %v1683
        %v2400 = vpop.permute.xlu0 %2399
        %2402 = vset.pattern.permute.xlu0 1
        %2403 = vperm.xlu0 %2402, %v1686
        %v2404 = vpop.permute.xlu0 %2403
        %2406 = vset.pattern.permute.xlu0 1
        %2407 = vperm.xlu0 %2406, %v1689
        %v2408 = vpop.permute.xlu0 %2407
        %2410 = vset.pattern.permute.xlu0 1
        %2411 = vperm.xlu0 %2410, %v1692
        %v2412 = vpop.permute.xlu0 %2411
        %2414 = vset.pattern.permute.xlu0 1
        %2415 = vperm.xlu0 %2414, %v1695
        %v2416 = vpop.permute.xlu0 %2415
        %2418 = vset.pattern.permute.xlu0 1
        %2419 = vperm.xlu0 %2418, %v1698
        %v2420 = vpop.permute.xlu0 %2419
        %2422 = vset.pattern.permute.xlu0 1
        %2423 = vperm.xlu0 %2422, %v1701
        %v2424 = vpop.permute.xlu0 %2423
        %2426 = vset.pattern.permute.xlu0 1
        %2427 = vperm.xlu0 %2426, %v1704
        %v2428 = vpop.permute.xlu0 %2427
        %2430 = vset.pattern.permute.xlu0 1
        %2431 = vperm.xlu0 %2430, %v1707
        %v2432 = vpop.permute.xlu0 %2431
        %2434 = vset.pattern.permute.xlu0 1
        %2435 = vperm.xlu0 %2434, %v1710
        %v2436 = vpop.permute.xlu0 %2435
        %2438 = vset.pattern.permute.xlu0 1
        %2439 = vperm.xlu0 %2438, %v1713
        %v2440 = vpop.permute.xlu0 %2439
        %2442 = vset.pattern.permute.xlu0 1
        %2443 = vperm.xlu0 %2442, %v1716
        %v2444 = vpop.permute.xlu0 %2443
        %2446 = vset.pattern.permute.xlu0 1
        %2447 = vperm.xlu0 %2446, %v1719
        %v2448 = vpop.permute.xlu0 %2447
        %2450 = vset.pattern.permute.xlu0 1
        %2451 = vperm.xlu0 %2450, %v1722
        %v2452 = vpop.permute.xlu0 %2451
        %2454 = vset.pattern.permute.xlu0 1
        %2455 = vperm.xlu0 %2454, %v1725
        %v2456 = vpop.permute.xlu0 %2455
        %2458 = vset.pattern.permute.xlu0 1
        %2459 = vperm.xlu0 %2458, %v1728
        %v2460 = vpop.permute.xlu0 %2459
        %2462 = vset.pattern.permute.xlu0 1
        %2463 = vperm.xlu0 %2462, %v1731
        %v2464 = vpop.permute.xlu0 %2463
        %2466 = vset.pattern.permute.xlu0 1
        %2467 = vperm.xlu0 %2466, %v1734
        %v2468 = vpop.permute.xlu0 %2467
        %2470 = vset.pattern.permute.xlu0 1
        %2471 = vperm.xlu0 %2470, %v1737
        %v2472 = vpop.permute.xlu0 %2471
        %2474 = vset.pattern.permute.xlu0 1
        %2475 = vperm.xlu0 %2474, %v1740
        %v2476 = vpop.permute.xlu0 %2475
        %2478 = vset.pattern.permute.xlu0 1
        %2479 = vperm.xlu0 %2478, %v1743
        %v2480 = vpop.permute.xlu0 %2479
        %v2482 = vmul.f32 %v1487, %v2356
        %v2483 = vmul.f32 %v1488, %v2360
        %v2484 = vmul.f32 %v1489, %v2364
        %v2485 = vmul.f32 %v1490, %v2368
        %v2486 = vmul.f32 %v1491, %v2372
        %v2487 = vmul.f32 %v1492, %v2376
        %v2488 = vmul.f32 %v1493, %v2380
        %v2489 = vmul.f32 %v1494, %v2384
        %v2490 = vmul.f32 %v1495, %v2388
        %v2491 = vmul.f32 %v1496, %v2392
        %v2492 = vmul.f32 %v1497, %v2396
        %v2493 = vmul.f32 %v1498, %v2400
        %v2494 = vmul.f32 %v1499, %v2404
        %v2495 = vmul.f32 %v1500, %v2408
        %v2496 = vmul.f32 %v1501, %v2412
        %v2497 = vmul.f32 %v1502, %v2416
        %v2498 = vmul.f32 %v1503, %v2420
        %v2499 = vmul.f32 %v1504, %v2424
        %v2500 = vmul.f32 %v1505, %v2428
        %v2501 = vmul.f32 %v1506, %v2432
        %v2502 = vmul.f32 %v1507, %v2436
        %v2503 = vmul.f32 %v1508, %v2440
        %v2504 = vmul.f32 %v1509, %v2444
        %v2505 = vmul.f32 %v1510, %v2448
        %v2506 = vmul.f32 %v1511, %v2452
        %v2507 = vmul.f32 %v1512, %v2456
        %v2508 = vmul.f32 %v1513, %v2460
        %v2509 = vmul.f32 %v1514, %v2464
        %v2510 = vmul.f32 %v1515, %v2468
        %v2511 = vmul.f32 %v1516, %v2472
        %v2512 = vmul.f32 %v1517, %v2476
        %v2513 = vmul.f32 %v1518, %v2480
        %v2514 = vadd.f32 %v2322, %v2482
        %v2515 = vadd.f32 %v2323, %v2483
        %v2516 = vadd.f32 %v2324, %v2484
        %v2517 = vadd.f32 %v2325, %v2485
        %v2518 = vadd.f32 %v2326, %v2486
        %v2519 = vadd.f32 %v2327, %v2487
        %v2520 = vadd.f32 %v2328, %v2488
        %v2521 = vadd.f32 %v2329, %v2489
        %v2522 = vadd.f32 %v2330, %v2490
        %v2523 = vadd.f32 %v2331, %v2491
        %v2524 = vadd.f32 %v2332, %v2492
        %v2525 = vadd.f32 %v2333, %v2493
        %v2526 = vadd.f32 %v2334, %v2494
        %v2527 = vadd.f32 %v2335, %v2495
        %v2528 = vadd.f32 %v2336, %v2496
        %v2529 = vadd.f32 %v2337, %v2497
        %v2530 = vadd.f32 %v2338, %v2498
        %v2531 = vadd.f32 %v2339, %v2499
        %v2532 = vadd.f32 %v2340, %v2500
        %v2533 = vadd.f32 %v2341, %v2501
        %v2534 = vadd.f32 %v2342, %v2502
        %v2535 = vadd.f32 %v2343, %v2503
        %v2536 = vadd.f32 %v2344, %v2504
        %v2537 = vadd.f32 %v2345, %v2505
        %v2538 = vadd.f32 %v2346, %v2506
        %v2539 = vadd.f32 %v2347, %v2507
        %v2540 = vadd.f32 %v2348, %v2508
        %v2541 = vadd.f32 %v2349, %v2509
        %v2542 = vadd.f32 %v2350, %v2510
        %v2543 = vadd.f32 %v2351, %v2511
        %v2544 = vadd.f32 %v2352, %v2512
        %v2545 = vadd.f32 %v2353, %v2513
        %v2546 = vperm.slane %v458, 1
        %v2547 = vadd.f32 %v2514, %v2546
        %v2548 = vadd.f32 %v2515, %v2546
        %v2549 = vadd.f32 %v2516, %v2546
        %v2550 = vadd.f32 %v2517, %v2546
        %v2551 = vadd.f32 %v2518, %v2546
        %v2552 = vadd.f32 %v2519, %v2546
        %v2553 = vadd.f32 %v2520, %v2546
        %v2554 = vadd.f32 %v2521, %v2546
        %v2555 = vadd.f32 %v2522, %v2546
        %v2556 = vadd.f32 %v2523, %v2546
        %v2557 = vadd.f32 %v2524, %v2546
        %v2558 = vadd.f32 %v2525, %v2546
        %v2559 = vadd.f32 %v2526, %v2546
        %v2560 = vadd.f32 %v2527, %v2546
        %v2561 = vadd.f32 %v2528, %v2546
        %v2562 = vadd.f32 %v2529, %v2546
        %v2563 = vadd.f32 %v2530, %v2546
        %v2564 = vadd.f32 %v2531, %v2546
        %v2565 = vadd.f32 %v2532, %v2546
        %v2566 = vadd.f32 %v2533, %v2546
        %v2567 = vadd.f32 %v2534, %v2546
        %v2568 = vadd.f32 %v2535, %v2546
        %v2569 = vadd.f32 %v2536, %v2546
        %v2570 = vadd.f32 %v2537, %v2546
        %v2571 = vadd.f32 %v2538, %v2546
        %v2572 = vadd.f32 %v2539, %v2546
        %v2573 = vadd.f32 %v2540, %v2546
        %v2574 = vadd.f32 %v2541, %v2546
        %v2575 = vadd.f32 %v2542, %v2546
        %v2576 = vadd.f32 %v2543, %v2546
        %v2577 = vadd.f32 %v2544, %v2546
        %v2578 = vadd.f32 %v2545, %v2546
        %2579 = vst [vmem:[%s377] sm:$0xff] %v2162
        %2580 = vst [vmem:[%s377 + $0x8] sm:$0xff] %v2163
        %2581 = vst [vmem:[%s377 + $0x10] sm:$0xff] %v2164
        %2582 = vst [vmem:[%s377 + $0x18] sm:$0xff] %v2165
        %2583 = vst [vmem:[%s377 + $0x20] sm:$0xff] %v2166
        %2584 = vst [vmem:[%s377 + $0x28] sm:$0xff] %v2167
        %2585 = vst [vmem:[%s377 + $0x30] sm:$0xff] %v2168
        %2586 = vst [vmem:[%s377 + $0x38] sm:$0xff] %v2169
        %2587 = vst [vmem:[%s377 + $0x40] sm:$0xff] %v2170
        %2588 = vst [vmem:[%s377 + $0x48] sm:$0xff] %v2171
        %2589 = vst [vmem:[%s377 + $0x50] sm:$0xff] %v2172
        %2590 = vst [vmem:[%s377 + $0x58] sm:$0xff] %v2173
        %2591 = vst [vmem:[%s377 + $0x60] sm:$0xff] %v2174
        %2592 = vst [vmem:[%s377 + $0x68] sm:$0xff] %v2175
        %2593 = vst [vmem:[%s377 + $0x70] sm:$0xff] %v2176
        %2594 = vst [vmem:[%s377 + $0x78] sm:$0xff] %v2177
        %2595 = vst [vmem:[%s377 + $0x80] sm:$0xff] %v2178
        %2596 = vst [vmem:[%s377 + $0x88] sm:$0xff] %v2179
        %2597 = vst [vmem:[%s377 + $0x90] sm:$0xff] %v2180
        %2598 = vst [vmem:[%s377 + $0x98] sm:$0xff] %v2181
        %2599 = vst [vmem:[%s377 + $0xa0] sm:$0xff] %v2182
        %2600 = vst [vmem:[%s377 + $0xa8] sm:$0xff] %v2183
        %2601 = vst [vmem:[%s377 + $0xb0] sm:$0xff] %v2184
        %2602 = vst [vmem:[%s377 + $0xb8] sm:$0xff] %v2185
        %2603 = vst [vmem:[%s377 + $0xc0] sm:$0xff] %v2186
        %2604 = vst [vmem:[%s377 + $0xc8] sm:$0xff] %v2187
        %2605 = vst [vmem:[%s377 + $0xd0] sm:$0xff] %v2188
        %2606 = vst [vmem:[%s377 + $0xd8] sm:$0xff] %v2189
        %2607 = vst [vmem:[%s377 + $0xe0] sm:$0xff] %v2190
        %2608 = vst [vmem:[%s377 + $0xe8] sm:$0xff] %v2191
        %2609 = vst [vmem:[%s377 + $0xf0] sm:$0xff] %v2192
        %2610 = vst [vmem:[%s377 + $0xf8] sm:$0xff] %v2193
        %2611 = vst [vmem:[%s384] sm:$0xff] %v2547
        %2612 = vst [vmem:[%s384 + $0x8] sm:$0xff] %v2548
        %2613 = vst [vmem:[%s384 + $0x10] sm:$0xff] %v2549
        %2614 = vst [vmem:[%s384 + $0x18] sm:$0xff] %v2550
        %2615 = vst [vmem:[%s384 + $0x20] sm:$0xff] %v2551
        %2616 = vst [vmem:[%s384 + $0x28] sm:$0xff] %v2552
        %2617 = vst [vmem:[%s384 + $0x30] sm:$0xff] %v2553
        %2618 = vst [vmem:[%s384 + $0x38] sm:$0xff] %v2554
        %2619 = vst [vmem:[%s384 + $0x40] sm:$0xff] %v2555
        %2620 = vst [vmem:[%s384 + $0x48] sm:$0xff] %v2556
        %2621 = vst [vmem:[%s384 + $0x50] sm:$0xff] %v2557
        %2622 = vst [vmem:[%s384 + $0x58] sm:$0xff] %v2558
        %2623 = vst [vmem:[%s384 + $0x60] sm:$0xff] %v2559
        %2624 = vst [vmem:[%s384 + $0x68] sm:$0xff] %v2560
        %2625 = vst [vmem:[%s384 + $0x70] sm:$0xff] %v2561
        %2626 = vst [vmem:[%s384 + $0x78] sm:$0xff] %v2562
        %2627 = vst [vmem:[%s384 + $0x80] sm:$0xff] %v2563
        %2628 = vst [vmem:[%s384 + $0x88] sm:$0xff] %v2564
        %2629 = vst [vmem:[%s384 + $0x90] sm:$0xff] %v2565
        %2630 = vst [vmem:[%s384 + $0x98] sm:$0xff] %v2566
        %2631 = vst [vmem:[%s384 + $0xa0] sm:$0xff] %v2567
        %2632 = vst [vmem:[%s384 + $0xa8] sm:$0xff] %v2568
        %2633 = vst [vmem:[%s384 + $0xb0] sm:$0xff] %v2569
        %2634 = vst [vmem:[%s384 + $0xb8] sm:$0xff] %v2570
        %2635 = vst [vmem:[%s384 + $0xc0] sm:$0xff] %v2571
        %2636 = vst [vmem:[%s384 + $0xc8] sm:$0xff] %v2572
        %2637 = vst [vmem:[%s384 + $0xd0] sm:$0xff] %v2573
        %2638 = vst [vmem:[%s384 + $0xd8] sm:$0xff] %v2574
        %2639 = vst [vmem:[%s384 + $0xe0] sm:$0xff] %v2575
        %2640 = vst [vmem:[%s384 + $0xe8] sm:$0xff] %v2576
        %2641 = vst [vmem:[%s384 + $0xf0] sm:$0xff] %v2577
        %2642 = vst [vmem:[%s384 + $0xf8] sm:$0xff] %v2578
        %s2643 = sand.u32 %s176, 1
        %s2644 = scalar_lea.sflag [#allocation4], %s2643
        %s2645 = sand.u32 %s176, 1
        %s2646 = smul.addr %s2645, 256
        %s2647 = scalar_lea.vmem [#allocation10], %s2646
        %s2648 = sand.u32 %s202, 1
        %s2649 = scalar_lea.sflag [#allocation12], %s2648
        %s2650 = sand.u32 %s202, 1
        %s2651 = smul.addr %s2650, 256
        %s2652 = scalar_lea.vmem [#allocation11], %s2651
        // Predicated region
        $region61: #{tpu_custom_call.1} parent=43 // pred_check
          %p2653 = pneg %p186
        $region62: #{tpu_custom_call.1} parent=43 // pred_check_branch
          %2655 = sbr.rel (%p2653) target = $region64
        $region63: #{tpu_custom_call.1} parent=43 // pred_region
          %s2656 = smul.u32 32, %s32
          %2658 = vsyncadd %s2644, 0
          %s2659 = smul.addr %s2656, 8
          %s2660 = scalar_lea.hbm %s6, %s2659
          %s2661 = sshll.u32 %s2647, 4
          %s2662 = int_to_ptr.vmem [resolvable:$true] %s2661
          %s2663 = sshll.u32 %s2660, 4
          %s2664 = int_to_ptr.hbm [resolvable:$true] %s2663
          %2669 = dma.vmem_to_hbm [thread:$0]  %s2662, 4096, %s2664, %s2644, 128, 128, 8
        $region64: #{tpu_custom_call.1} parent=43 // pred_fallthru
          _
        // Predicated region
        $region65: #{tpu_custom_call.1} parent=43 // pred_check
          %p2670 = pneg %p212
        $region66: #{tpu_custom_call.1} parent=43 // pred_check_branch
          %2672 = sbr.rel (%p2670) target = $region68
        $region67: #{tpu_custom_call.1} parent=43 // pred_region
          %s2673 = smul.u32 32, %s32
          %2675 = vsyncadd %s2649, 0
          %s2676 = smul.addr %s2673, 8
          %s2677 = scalar_lea.hbm %s7, %s2676
          %s2678 = sshll.u32 %s2652, 4
          %s2679 = int_to_ptr.vmem [resolvable:$true] %s2678
          %s2680 = sshll.u32 %s2677, 4
          %s2681 = int_to_ptr.hbm [resolvable:$true] %s2680
          %2686 = dma.vmem_to_hbm [thread:$0]  %s2679, 4096, %s2681, %s2649, 128, 128, 8
        $region68: #{tpu_custom_call.1} parent=43 // pred_fallthru
          _
      $region44: #{tpu_custom_call.1} parent=5 // pred_fallthru
        _
      %p2687 = scmp.le.s32.totalorder 2, %s27
      // Predicated region
      $region69: #{tpu_custom_call.1} parent=5 // pred_check
        %p2688 = pneg %p2687
      $region70: #{tpu_custom_call.1} parent=5 // pred_check_branch
        %2690 = sbr.rel (%p2688) target = $region72
      $region71: #{tpu_custom_call.1} parent=5 // pred_region
        %s2691 = ssub.s32 %s27, 2
        // Predicated region
        $region73: #{tpu_custom_call.1} parent=71 // pred_check
          %p2692 = pneg %p192
        $region74: #{tpu_custom_call.1} parent=71 // pred_check_branch
          %2694 = sbr.rel (%p2692) target = $region76
        $region75: #{tpu_custom_call.1} parent=71 // pred_region
          %s2695 = sand.u32 %s177, 1
          %s2696 = scalar_lea.sflag [#allocation4], %s2695
          %s2697 = sand.u32 %s177, 1
          %s2698 = smul.addr %s2697, 256
          %s2699 = scalar_lea.vmem [#allocation10], %s2698
          %2701 = dma.done %s2696, 4096
        $region76: #{tpu_custom_call.1} parent=71 // pred_fallthru
          _
        // Predicated region
        $region77: #{tpu_custom_call.1} parent=71 // pred_check
          %p2702 = pneg %p218
        $region78: #{tpu_custom_call.1} parent=71 // pred_check_branch
          %2704 = sbr.rel (%p2702) target = $region80
        $region79: #{tpu_custom_call.1} parent=71 // pred_region
          %s2705 = sand.u32 %s203, 1
          %s2706 = scalar_lea.sflag [#allocation12], %s2705
          %s2707 = sand.u32 %s203, 1
          %s2708 = smul.addr %s2707, 256
          %s2709 = scalar_lea.vmem [#allocation11], %s2708
          %2711 = dma.done %s2706, 4096
        $region80: #{tpu_custom_call.1} parent=71 // pred_fallthru
          _
      $region72: #{tpu_custom_call.1} parent=5 // pred_fallthru
        _
    $region6: #{tpu_custom_call.1} parent=1 // loop_footer
      %s31 = sadd.s32 1, %s27
    $region7: #{tpu_custom_call.1} parent=1 // loop_footer_branch
      %26 = sbr.rel target = $region3
    $region8: #{tpu_custom_call.1} parent=1 // loop_exit
      _
    %2712 = vsyncpa [#allocation3], 1
    %s2713 = scalar_lea.sflag [#allocation3], 1
    %2714 = vsyncpa %s2713, 1
    %2715 = vsyncpa [#allocation6], 1
    %s2716 = scalar_lea.sflag [#allocation6], 1
    %2717 = vsyncpa %s2716, 1
    %2718 = vsyncpa [#allocation9], 1
    %2719 = vsyncpa [#allocation4], 1
    %s2720 = scalar_lea.sflag [#allocation4], 1
    %2721 = vsyncpa %s2720, 1
    %2722 = vsyncpa [#allocation12], 1
    %s2723 = scalar_lea.sflag [#allocation12], 1
    %2724 = vsyncpa %s2723, 1

</llo_original>
